<compile_context>
chip_gen: v7x
topology: tpu7x:2x2x1
jax: 0.10.0
libtpu: 0.0.40
codegen_flags: <defaults>
</compile_context>

<pallas_src>
import jax
import jax.numpy as jnp
from jax import lax
from jax.experimental import pallas as pl
from jax.experimental.pallas import tpu as pltpu

# ---- small demo configuration consistent with the module ----
HIDDEN_SIZE = 1          # hidden_size = 1
INPUT_SIZE_DYN = 1       # input_size_dyn = 1
GATE_DIM_O = 4           # cfg['gate_dim_o']; node receives gate_dim_o - 1
GATE_DIM_L = 3           # cfg['gate_dim_l']
SEQ_LEN = 16             # small stand-in for timeLen
TIME_LAG = 0
SPIN_LEN = 4             # small stand-in for spinLen
TRAIN_TIME_LEN = 12      # small stand-in for traintimeLen
DROPOUT = 0.0            # nn.Dropout(p=0.0) -> identity in forward

OUT_LANES = 128          # lane-dense output slab width (cols: 0=c, 1=oo, 2=ol)


def _sigmoid(x):
    # exp -> EUP; approximate reciprocal -> EUP (otherwise-idle slot), keeping
    # the sequential recurrence dependency chain as short as possible.
    return pl.reciprocal(1.0 + jnp.exp(-x), approx=True)


def mcpbrnn_seq_kernel(scal_ref, x_ref, pet_ref,
                       w1_ref, b1_ref, w2_ref, by_ref, ig_ref,
                       out_ref):
    """Whole-sequence MCPBRNN recurrence in a single kernel invocation.

    Gate ANNs are packed along sublanes: row 0 = output (runoff) gate,
    row 1 = loss (ET) gate, so each step issues one tanh / lane-sum / exp /
    reciprocal for both gates.  out_ref is a lane-dense (T, 128) f32 slab;
    only columns 0..2 (c, oo, ol) are written inside the loop.
    """
    T = x_ref.shape[0]

    # ---- loop-invariant loads & precomputation (hoisted out of the loop) ----
    c_mean = jnp.full((1, 1), scal_ref[0], jnp.float32)          # (1, 1)
    inv_c_std = 1.0 / jnp.full((1, 1), scal_ref[1], jnp.float32)  # (1, 1), one exact divide

    w1 = w1_ref[...]          # (2, G)  first-layer weights   [out-gate; loss-gate]
    b1 = b1_ref[...]          # (2, G)  first-layer biases
    w2 = w2_ref[...]          # (2, G)  second-layer weights
    b_y = by_ref[...]         # (2, 1)  output biases [b_yom; b_ylm]
    ig = ig_ref[...]          # (1, 1)  constant input gate sigmoid(b_i), computed in wrapper

    # Deterministic output slab (unused columns stay zero).
    out_ref[...] = jnp.zeros_like(out_ref)

    def step(t, c_prev):                       # c_prev: (1, 1) f32 storage state
        u = x_ref[t]                           # precipitation at step t (SMEM scalar)
        pet_t = pet_ref[t]                     # PET at step t (SMEM scalar)

        c_norm = (c_prev - c_mean) * inv_c_std                       # (1, 1)

        # Both gate ANNs at once: one tanh over (2, G), one lane-reduce to
        # (2, 1), one exp + one approx reciprocal for both sigmoids.
        z = jnp.tanh(c_norm * w1 + b1)                               # (2, G)
        s = b_y + jnp.sum(z * w2, axis=-1, keepdims=True)            # (2, 1)
        g = _sigmoid(s)                                              # (2, 1)

        oo = g[0:1, :]                         # output (runoff) gate, (1, 1)
        ol = g[1:2, :]                         # loss (ET) gate,      (1, 1)

        h = oo * c_prev                        # runoff from storage
        lc = jnp.minimum(ol * c_prev, pet_t)   # PET-constrained ET loss
        # Exact mass-conserving storage update (no reciprocal on the chain).
        c_new = c_prev - h - lc + ig * u

        # Store only the recurrence-coupled values; everything else is derived
        # vectorized in the wrapper.  3 masked stores/step (was 10).
        row = pl.ds(t, 1)
        out_ref[row, 0:1] = c_new
        out_ref[row, 1:2] = oo
        out_ref[row, 2:3] = ol
        return c_new

    c0 = jnp.zeros((1, 1), jnp.float32)        # c_0 = 0
    unroll = True if T <= 64 else 8            # full unroll only for small static T
    lax.fori_loop(0, T, step, c0, unroll=unroll)


def _pack_gate_params(params):
    """Stack output-gate and loss-gate ANN params into (2, G) / (2, 1) tiles.

    Zero-padding the narrower gate is exact: tanh(0*c + 0) = 0 contributes
    0 * w2_pad = 0 to the pre-sigmoid sum.
    """
    go = params["w_o1"].shape[-1]
    gl = params["w_l1"].shape[-1]
    gmax = max(go, gl)

    def pad(a):
        a = jnp.asarray(a, jnp.float32)
        return jnp.pad(a, ((0, 0), (0, gmax - a.shape[-1])))

    w1 = jnp.concatenate([pad(params["w_o1"]), pad(params["w_l1"])], axis=0)   # (2, G)
    b1 = jnp.concatenate([pad(params["b_o1"]), pad(params["b_l1"])], axis=0)   # (2, G)
    w2 = jnp.concatenate([pad(params["w_o2"]), pad(params["w_l2"])], axis=0)   # (2, G)
    by = jnp.concatenate([jnp.asarray(params["b_yom"], jnp.float32),
                          jnp.asarray(params["b_ylm"], jnp.float32)], axis=0)  # (2, 1)
    return w1, b1, w2, by


def init_params(key):
    go = GATE_DIM_O - 1
    gl = GATE_DIM_L
    ks = jax.random.split(key, 9)

    def nrm(k, shape, scale=0.5):
        return (scale * jax.random.normal(k, shape)).astype(jnp.float32)

    return {
        "w_o1": nrm(ks[0], (1, go)),
        "b_o1": nrm(ks[1], (1, go)),
        "w_o2": nrm(ks[2], (1, go)),
        "b_yom": nrm(ks[3], (1, 1)),
        "w_l1": nrm(ks[4], (1, gl)),
        "b_l1": nrm(ks[5], (1, gl)),
        "w_l2": nrm(ks[6], (1, gl)),
        "b_ylm": nrm(ks[7], (1, 1)),
        "b_i": nrm(ks[8], (1, 1)) + 2.0,   # bias input gate toward 1 (most precip enters storage)
    }


def model_complex_previous_forward(params, x_d, epoch, time_lag, y_eval, c_mean, c_std):
    # TODO(synk): the original cell also threads `epoch` / `time_lag` through
    # spin-up bookkeeping; that logic does not affect the returned tensors and
    # is not reconstructed here.
    del epoch, time_lag
    T = x_d.shape[0]

    x = x_d[:, 0].astype(jnp.float32)          # (T,) precipitation
    pet = y_eval[:, 1].astype(jnp.float32)     # (T,) PET
    cstat = jnp.array([c_mean, c_std], dtype=jnp.float32)

    w1, b1, w2, by = _pack_gate_params(params)
    # Constant input gate: computed once (exact sigmoid) and used both by the
    # kernel recurrence and the returned `i` / `bp` columns.
    ig_scalar = jax.nn.sigmoid(jnp.asarray(params["b_i"], jnp.float32).reshape(()))
    ig_in = ig_scalar.reshape(1, 1)

    smem = pl.BlockSpec(memory_space=pltpu.MemorySpace.SMEM)
    vmem = pl.BlockSpec(memory_space=pltpu.MemorySpace.VMEM)

    # Single invocation (no grid): whole sequence + parameters fit trivially in
    # VMEM/SMEM; one lane-dense (T, 128) output slab written back with one DMA.
    res = pl.pallas_call(
        mcpbrnn_seq_kernel,
        out_shape=jax.ShapeDtypeStruct((T, OUT_LANES), jnp.float32),
        in_specs=[smem, smem, smem, vmem, vmem, vmem, vmem, vmem],
        out_specs=vmem,
    )(cstat, x, pet, w1, b1, w2, by, ig_in)

    c = res[:, 0]     # storage after each step
    oo = res[:, 1]    # output (runoff) gate
    ol = res[:, 2]    # loss (ET) gate

    # ---- diagnostics derived vectorized over T (not state-coupled) ----
    c_prev = jnp.concatenate([jnp.zeros((1,), jnp.float32), c[:-1]])
    h = oo * c_prev                          # runoff (bit-identical to in-kernel value)
    l = ol * c_prev                          # unconstrained ET loss
    lc = jnp.minimum(l, pet)                 # PET-constrained ET loss
    bp = (1.0 - ig_scalar) * x               # bypass flow
    ig_col = jnp.broadcast_to(ig_scalar, (T,))
    olc = lc / (c_prev + 1e-6)               # effective constrained loss gate (diagnostic)
    f = 1.0 - oo - olc                       # retention fraction (diagnostic)

    # obs_std is returned by the node but discarded by Model_complex_previous;
    # computed here as plain-JAX glue only.
    _obs_std = jnp.std(y_eval[SPIN_LEN:TRAIN_TIME_LEN, 0])

    def col(v):
        return v.reshape(T, HIDDEN_SIZE)

    out = col(h)   # nn.Dropout(p=0.0) is identity in the forward pass
    return (out, col(h), col(c), col(l), col(lc), col(bp),
            col(ig_col), col(oo), col(ol), col(olc), col(f))


if __name__ == "__main__":
    key = jax.random.PRNGKey(0)
    k_x, k_pet, k_obs = jax.random.split(key, 3)
    T = SEQ_LEN

    x_d = jnp.abs(jax.random.normal(k_x, (T, INPUT_SIZE_DYN))).astype(jnp.float32)
    obs = jnp.abs(jax.random.normal(k_obs, (T, 1))).astype(jnp.float32)
    pet = (0.5 * jnp.abs(jax.random.normal(k_pet, (T, 1)))).astype(jnp.float32)
    y_eval = jnp.concatenate([obs, pet], axis=1)   # col0 = observed flow, col1 = PET

    params = init_params(jax.random.PRNGKey(42))

    outs = model_complex_previous_forward(
        params, x_d, epoch=0, time_lag=TIME_LAG, y_eval=y_eval,
        c_mean=0.5, c_std=1.0)
    outs = jax.block_until_ready(outs)

    assert len(outs) == 11
    assert all(o.shape == (T, HIDDEN_SIZE) for o in outs)
    assert all(bool(jnp.all(jnp.isfinite(o))) for o in outs)
    print("KERNEL_OK")
</pallas_src>

<mosaic_0001>
module attributes {stable_mosaic.version = 11 : i64} {
  func.func @mcpbrnn_seq_kernel(%arg0: memref<2xf32, #tpu.memory_space<smem>>, %arg1: memref<16xf32, #tpu.memory_space<smem>>, %arg2: memref<16xf32, #tpu.memory_space<smem>>, %arg3: memref<2x3xf32, #tpu.memory_space<vmem>>, %arg4: memref<2x3xf32, #tpu.memory_space<vmem>>, %arg5: memref<2x3xf32, #tpu.memory_space<vmem>>, %arg6: memref<2x1xf32, #tpu.memory_space<vmem>>, %arg7: memref<1x1xf32, #tpu.memory_space<vmem>>, %arg8: memref<16x128xf32, #tpu.memory_space<vmem>>) attributes {dimension_semantics = [], scalar_prefetch = 0 : i64, scratch_operands = 0 : i64, tpu.core_type = #tpu.core_type<tc>} {
    %c0 = arith.constant 0 : index
    %0 = memref.load %arg0[%c0] : memref<2xf32, #tpu.memory_space<smem>>
    %1 = vector.broadcast %0 : f32 to vector<1x1xf32>
    %c1 = arith.constant 1 : index
    %2 = memref.load %arg0[%c1] : memref<2xf32, #tpu.memory_space<smem>>
    %3 = vector.broadcast %2 : f32 to vector<1x1xf32>
    %cst = arith.constant 1.000000e+00 : f32
    %4 = vector.broadcast %cst : f32 to vector<1x1xf32>
    %5 = arith.divf %4, %3 : vector<1x1xf32>
    %c0_0 = arith.constant 0 : index
    %c0_1 = arith.constant 0 : index
    %6 = vector.load %arg3[%c0_0, %c0_1] : memref<2x3xf32, #tpu.memory_space<vmem>>, vector<2x3xf32>
    %c0_2 = arith.constant 0 : index
    %c0_3 = arith.constant 0 : index
    %7 = vector.load %arg4[%c0_2, %c0_3] : memref<2x3xf32, #tpu.memory_space<vmem>>, vector<2x3xf32>
    %c0_4 = arith.constant 0 : index
    %c0_5 = arith.constant 0 : index
    %8 = vector.load %arg5[%c0_4, %c0_5] : memref<2x3xf32, #tpu.memory_space<vmem>>, vector<2x3xf32>
    %c0_6 = arith.constant 0 : index
    %c0_7 = arith.constant 0 : index
    %9 = vector.load %arg6[%c0_6, %c0_7] : memref<2x1xf32, #tpu.memory_space<vmem>>, vector<2x1xf32>
    %c0_8 = arith.constant 0 : index
    %c0_9 = arith.constant 0 : index
    %10 = vector.load %arg7[%c0_8, %c0_9] : memref<1x1xf32, #tpu.memory_space<vmem>>, vector<1x1xf32>
    %cst_10 = arith.constant 0.000000e+00 : f32
    %11 = vector.broadcast %cst_10 : f32 to vector<16x128xf32>
    %c0_11 = arith.constant 0 : index
    %c0_12 = arith.constant 0 : index
    %12 = vector.load %arg8[%c0_11, %c0_12] : memref<16x128xf32, #tpu.memory_space<vmem>>, vector<16x128xf32>
    tpu.vector_store %arg8[%c0_11, %c0_12], %11 {strides = array<i32>} : memref<16x128xf32, #tpu.memory_space<vmem>>, vector<16x128xf32>,
    %cst_13 = arith.constant 0.000000e+00 : f32
    %13 = vector.broadcast %cst_13 : f32 to vector<1x1xf32>
    %c0_i32 = arith.constant 0 : i32
    %14 = arith.index_cast %c0_i32 : i32 to index
    %15 = memref.load %arg1[%14] : memref<16xf32, #tpu.memory_space<smem>>
    %16 = arith.index_cast %c0_i32 : i32 to index
    %17 = memref.load %arg2[%16] : memref<16xf32, #tpu.memory_space<smem>>
    %18 = arith.subf %13, %1 : vector<1x1xf32>
    %19 = arith.mulf %18, %5 : vector<1x1xf32>
    %20 = vector.broadcast %19 : vector<1x1xf32> to vector<2x3xf32>
    %21 = arith.mulf %20, %6 : vector<2x3xf32>
    %22 = arith.addf %21, %7 : vector<2x3xf32>
    %23 = math.tanh %22 : vector<2x3xf32>
    %24 = arith.mulf %23, %8 : vector<2x3xf32>
    %cst_14 = arith.constant dense<0.000000e+00> : vector<2xf32>
    %25 = vector.multi_reduction <add>, %24, %cst_14 [1] : vector<2x3xf32> to vector<2xf32>
    %26 = vector.shape_cast %25 : vector<2xf32> to vector<2x1xf32>
    %27 = arith.addf %9, %26 : vector<2x1xf32>
    %cst_15 = arith.constant 0.000000e+00 : f32
    %28 = vector.broadcast %cst_15 : f32 to vector<2x1xf32>
    %29 = arith.subf %28, %27 : vector<2x1xf32>
    %30 = math.exp %29 : vector<2x1xf32>
    %cst_16 = arith.constant 1.000000e+00 : f32
    %31 = vector.broadcast %cst_16 : f32 to vector<2x1xf32>
    %32 = arith.addf %31, %30 : vector<2x1xf32>
    %33 = tpu.reciprocal %32 {approx = true} : vector<2x1xf32> -> vector<2x1xf32>
    %34 = vector.extract_strided_slice %33 {offsets = [0, 0], sizes = [1, 1], strides = [1, 1]} : vector<2x1xf32> to vector<1x1xf32>
    %35 = vector.extract_strided_slice %33 {offsets = [1, 0], sizes = [1, 1], strides = [1, 1]} : vector<2x1xf32> to vector<1x1xf32>
    %36 = arith.mulf %34, %13 : vector<1x1xf32>
    %37 = arith.mulf %35, %13 : vector<1x1xf32>
    %38 = vector.broadcast %17 : f32 to vector<1x1xf32>
    %39 = arith.minimumf %37, %38 : vector<1x1xf32>
    %40 = arith.subf %13, %36 : vector<1x1xf32>
    %41 = arith.subf %40, %39 : vector<1x1xf32>
    %42 = vector.broadcast %15 : f32 to vector<1x1xf32>
    %43 = arith.mulf %10, %42 : vector<1x1xf32>
    %44 = arith.addf %41, %43 : vector<1x1xf32>
    %45 = arith.index_cast %c0_i32 : i32 to index
    %c0_17 = arith.constant 0 : index
    %46 = vector.load %arg8[%45, %c0_17] : memref<16x128xf32, #tpu.memory_space<vmem>>, vector<1x1xf32>
    tpu.vector_store %arg8[%45, %c0_17], %44 {strides = array<i32>} : memref<16x128xf32, #tpu.memory_space<vmem>>, vector<1x1xf32>,
    %47 = arith.index_cast %c0_i32 : i32 to index
    %c1_18 = arith.constant 1 : index
    %48 = vector.load %arg8[%47, %c1_18] : memref<16x128xf32, #tpu.memory_space<vmem>>, vector<1x1xf32>
    tpu.vector_store %arg8[%47, %c1_18], %34 {strides = array<i32>} : memref<16x128xf32, #tpu.memory_space<vmem>>, vector<1x1xf32>,
    %49 = arith.index_cast %c0_i32 : i32 to index
    %c2 = arith.constant 2 : index
    %50 = vector.load %arg8[%49, %c2] : memref<16x128xf32, #tpu.memory_space<vmem>>, vector<1x1xf32>
    tpu.vector_store %arg8[%49, %c2], %35 {strides = array<i32>} : memref<16x128xf32, #tpu.memory_space<vmem>>, vector<1x1xf32>,
    %c1_i32 = arith.constant 1 : i32
    %51 = arith.index_cast %c1_i32 : i32 to index
    %52 = memref.load %arg1[%51] : memref<16xf32, #tpu.memory_space<smem>>
    %53 = arith.index_cast %c1_i32 : i32 to index
    %54 = memref.load %arg2[%53] : memref<16xf32, #tpu.memory_space<smem>>
    %55 = arith.subf %44, %1 : vector<1x1xf32>
    %56 = arith.mulf %55, %5 : vector<1x1xf32>
    %57 = vector.broadcast %56 : vector<1x1xf32> to vector<2x3xf32>
    %58 = arith.mulf %57, %6 : vector<2x3xf32>
    %59 = arith.addf %58, %7 : vector<2x3xf32>
    %60 = math.tanh %59 : vector<2x3xf32>
    %61 = arith.mulf %60, %8 : vector<2x3xf32>
    %cst_19 = arith.constant dense<0.000000e+00> : vector<2xf32>
    %62 = vector.multi_reduction <add>, %61, %cst_19 [1] : vector<2x3xf32> to vector<2xf32>
    %63 = vector.shape_cast %62 : vector<2xf32> to vector<2x1xf32>
    %64 = arith.addf %9, %63 : vector<2x1xf32>
    %cst_20 = arith.constant 0.000000e+00 : f32
    %65 = vector.broadcast %cst_20 : f32 to vector<2x1xf32>
    %66 = arith.subf %65, %64 : vector<2x1xf32>
    %67 = math.exp %66 : vector<2x1xf32>
    %cst_21 = arith.constant 1.000000e+00 : f32
    %68 = vector.broadcast %cst_21 : f32 to vector<2x1xf32>
    %69 = arith.addf %68, %67 : vector<2x1xf32>
    %70 = tpu.reciprocal %69 {approx = true} : vector<2x1xf32> -> vector<2x1xf32>
    %71 = vector.extract_strided_slice %70 {offsets = [0, 0], sizes = [1, 1], strides = [1, 1]} : vector<2x1xf32> to vector<1x1xf32>
    %72 = vector.extract_strided_slice %70 {offsets = [1, 0], sizes = [1, 1], strides = [1, 1]} : vector<2x1xf32> to vector<1x1xf32>
    %73 = arith.mulf %71, %44 : vector<1x1xf32>
    %74 = arith.mulf %72, %44 : vector<1x1xf32>
    %75 = vector.broadcast %54 : f32 to vector<1x1xf32>
    %76 = arith.minimumf %74, %75 : vector<1x1xf32>
    %77 = arith.subf %44, %73 : vector<1x1xf32>
    %78 = arith.subf %77, %76 : vector<1x1xf32>
    %79 = vector.broadcast %52 : f32 to vector<1x1xf32>
    %80 = arith.mulf %10, %79 : vector<1x1xf32>
    %81 = arith.addf %78, %80 : vector<1x1xf32>
    %82 = arith.index_cast %c1_i32 : i32 to index
    %c0_22 = arith.constant 0 : index
    %83 = vector.load %arg8[%82, %c0_22] : memref<16x128xf32, #tpu.memory_space<vmem>>, vector<1x1xf32>
    tpu.vector_store %arg8[%82, %c0_22], %81 {strides = array<i32>} : memref<16x128xf32, #tpu.memory_space<vmem>>, vector<1x1xf32>,
    %84 = arith.index_cast %c1_i32 : i32 to index
    %c1_23 = arith.constant 1 : index
    %85 = vector.load %arg8[%84, %c1_23] : memref<16x128xf32, #tpu.memory_space<vmem>>, vector<1x1xf32>
    tpu.vector_store %arg8[%84, %c1_23], %71 {strides = array<i32>} : memref<16x128xf32, #tpu.memory_space<vmem>>, vector<1x1xf32>,
    %86 = arith.index_cast %c1_i32 : i32 to index
    %c2_24 = arith.constant 2 : index
    %87 = vector.load %arg8[%86, %c2_24] : memref<16x128xf32, #tpu.memory_space<vmem>>, vector<1x1xf32>
    tpu.vector_store %arg8[%86, %c2_24], %72 {strides = array<i32>} : memref<16x128xf32, #tpu.memory_space<vmem>>, vector<1x1xf32>,
    %c2_i32 = arith.constant 2 : i32
    %88 = arith.index_cast %c2_i32 : i32 to index
    %89 = memref.load %arg1[%88] : memref<16xf32, #tpu.memory_space<smem>>
    %90 = arith.index_cast %c2_i32 : i32 to index
    %91 = memref.load %arg2[%90] : memref<16xf32, #tpu.memory_space<smem>>
    %92 = arith.subf %81, %1 : vector<1x1xf32>
    %93 = arith.mulf %92, %5 : vector<1x1xf32>
    %94 = vector.broadcast %93 : vector<1x1xf32> to vector<2x3xf32>
    %95 = arith.mulf %94, %6 : vector<2x3xf32>
    %96 = arith.addf %95, %7 : vector<2x3xf32>
    %97 = math.tanh %96 : vector<2x3xf32>
    %98 = arith.mulf %97, %8 : vector<2x3xf32>
    %cst_25 = arith.constant dense<0.000000e+00> : vector<2xf32>
    %99 = vector.multi_reduction <add>, %98, %cst_25 [1] : vector<2x3xf32> to vector<2xf32>
    %100 = vector.shape_cast %99 : vector<2xf32> to vector<2x1xf32>
    %101 = arith.addf %9, %100 : vector<2x1xf32>
    %cst_26 = arith.constant 0.000000e+00 : f32
    %102 = vector.broadcast %cst_26 : f32 to vector<2x1xf32>
    %103 = arith.subf %102, %101 : vector<2x1xf32>
    %104 = math.exp %103 : vector<2x1xf32>
    %cst_27 = arith.constant 1.000000e+00 : f32
    %105 = vector.broadcast %cst_27 : f32 to vector<2x1xf32>
    %106 = arith.addf %105, %104 : vector<2x1xf32>
    %107 = tpu.reciprocal %106 {approx = true} : vector<2x1xf32> -> vector<2x1xf32>
    %108 = vector.extract_strided_slice %107 {offsets = [0, 0], sizes = [1, 1], strides = [1, 1]} : vector<2x1xf32> to vector<1x1xf32>
    %109 = vector.extract_strided_slice %107 {offsets = [1, 0], sizes = [1, 1], strides = [1, 1]} : vector<2x1xf32> to vector<1x1xf32>
    %110 = arith.mulf %108, %81 : vector<1x1xf32>
    %111 = arith.mulf %109, %81 : vector<1x1xf32>
    %112 = vector.broadcast %91 : f32 to vector<1x1xf32>
    %113 = arith.minimumf %111, %112 : vector<1x1xf32>
    %114 = arith.subf %81, %110 : vector<1x1xf32>
    %115 = arith.subf %114, %113 : vector<1x1xf32>
    %116 = vector.broadcast %89 : f32 to vector<1x1xf32>
    %117 = arith.mulf %10, %116 : vector<1x1xf32>
    %118 = arith.addf %115, %117 : vector<1x1xf32>
    %119 = arith.index_cast %c2_i32 : i32 to index
    %c0_28 = arith.constant 0 : index
    %120 = vector.load %arg8[%119, %c0_28] : memref<16x128xf32, #tpu.memory_space<vmem>>, vector<1x1xf32>
    tpu.vector_store %arg8[%119, %c0_28], %118 {strides = array<i32>} : memref<16x128xf32, #tpu.memory_space<vmem>>, vector<1x1xf32>,
    %121 = arith.index_cast %c2_i32 : i32 to index
    %c1_29 = arith.constant 1 : index
    %122 = vector.load %arg8[%121, %c1_29] : memref<16x128xf32, #tpu.memory_space<vmem>>, vector<1x1xf32>
    tpu.vector_store %arg8[%121, %c1_29], %108 {strides = array<i32>} : memref<16x128xf32, #tpu.memory_space<vmem>>, vector<1x1xf32>,
    %123 = arith.index_cast %c2_i32 : i32 to index
    %c2_30 = arith.constant 2 : index
    %124 = vector.load %arg8[%123, %c2_30] : memref<16x128xf32, #tpu.memory_space<vmem>>, vector<1x1xf32>
    tpu.vector_store %arg8[%123, %c2_30], %109 {strides = array<i32>} : memref<16x128xf32, #tpu.memory_space<vmem>>, vector<1x1xf32>,
    %c3_i32 = arith.constant 3 : i32
    %125 = arith.index_cast %c3_i32 : i32 to index
    %126 = memref.load %arg1[%125] : memref<16xf32, #tpu.memory_space<smem>>
    %127 = arith.index_cast %c3_i32 : i32 to index
    %128 = memref.load %arg2[%127] : memref<16xf32, #tpu.memory_space<smem>>
    %129 = arith.subf %118, %1 : vector<1x1xf32>
    %130 = arith.mulf %129, %5 : vector<1x1xf32>
    %131 = vector.broadcast %130 : vector<1x1xf32> to vector<2x3xf32>
    %132 = arith.mulf %131, %6 : vector<2x3xf32>
    %133 = arith.addf %132, %7 : vector<2x3xf32>
    %134 = math.tanh %133 : vector<2x3xf32>
    %135 = arith.mulf %134, %8 : vector<2x3xf32>
    %cst_31 = arith.constant dense<0.000000e+00> : vector<2xf32>
    %136 = vector.multi_reduction <add>, %135, %cst_31 [1] : vector<2x3xf32> to vector<2xf32>
    %137 = vector.shape_cast %136 : vector<2xf32> to vector<2x1xf32>
    %138 = arith.addf %9, %137 : vector<2x1xf32>
    %cst_32 = arith.constant 0.000000e+00 : f32
    %139 = vector.broadcast %cst_32 : f32 to vector<2x1xf32>
    %140 = arith.subf %139, %138 : vector<2x1xf32>
    %141 = math.exp %140 : vector<2x1xf32>
    %cst_33 = arith.constant 1.000000e+00 : f32
    %142 = vector.broadcast %cst_33 : f32 to vector<2x1xf32>
    %143 = arith.addf %142, %141 : vector<2x1xf32>
    %144 = tpu.reciprocal %143 {approx = true} : vector<2x1xf32> -> vector<2x1xf32>
    %145 = vector.extract_strided_slice %144 {offsets = [0, 0], sizes = [1, 1], strides = [1, 1]} : vector<2x1xf32> to vector<1x1xf32>
    %146 = vector.extract_strided_slice %144 {offsets = [1, 0], sizes = [1, 1], strides = [1, 1]} : vector<2x1xf32> to vector<1x1xf32>
    %147 = arith.mulf %145, %118 : vector<1x1xf32>
    %148 = arith.mulf %146, %118 : vector<1x1xf32>
    %149 = vector.broadcast %128 : f32 to vector<1x1xf32>
    %150 = arith.minimumf %148, %149 : vector<1x1xf32>
    %151 = arith.subf %118, %147 : vector<1x1xf32>
    %152 = arith.subf %151, %150 : vector<1x1xf32>
    %153 = vector.broadcast %126 : f32 to vector<1x1xf32>
    %154 = arith.mulf %10, %153 : vector<1x1xf32>
    %155 = arith.addf %152, %154 : vector<1x1xf32>
    %156 = arith.index_cast %c3_i32 : i32 to index
    %c0_34 = arith.constant 0 : index
    %157 = vector.load %arg8[%156, %c0_34] : memref<16x128xf32, #tpu.memory_space<vmem>>, vector<1x1xf32>
    tpu.vector_store %arg8[%156, %c0_34], %155 {strides = array<i32>} : memref<16x128xf32, #tpu.memory_space<vmem>>, vector<1x1xf32>,
    %158 = arith.index_cast %c3_i32 : i32 to index
    %c1_35 = arith.constant 1 : index
    %159 = vector.load %arg8[%158, %c1_35] : memref<16x128xf32, #tpu.memory_space<vmem>>, vector<1x1xf32>
    tpu.vector_store %arg8[%158, %c1_35], %145 {strides = array<i32>} : memref<16x128xf32, #tpu.memory_space<vmem>>, vector<1x1xf32>,
    %160 = arith.index_cast %c3_i32 : i32 to index
    %c2_36 = arith.constant 2 : index
    %161 = vector.load %arg8[%160, %c2_36] : memref<16x128xf32, #tpu.memory_space<vmem>>, vector<1x1xf32>
    tpu.vector_store %arg8[%160, %c2_36], %146 {strides = array<i32>} : memref<16x128xf32, #tpu.memory_space<vmem>>, vector<1x1xf32>,
    %c4_i32 = arith.constant 4 : i32
    %162 = arith.index_cast %c4_i32 : i32 to index
    %163 = memref.load %arg1[%162] : memref<16xf32, #tpu.memory_space<smem>>
    %164 = arith.index_cast %c4_i32 : i32 to index
    %165 = memref.load %arg2[%164] : memref<16xf32, #tpu.memory_space<smem>>
    %166 = arith.subf %155, %1 : vector<1x1xf32>
    %167 = arith.mulf %166, %5 : vector<1x1xf32>
    %168 = vector.broadcast %167 : vector<1x1xf32> to vector<2x3xf32>
    %169 = arith.mulf %168, %6 : vector<2x3xf32>
    %170 = arith.addf %169, %7 : vector<2x3xf32>
    %171 = math.tanh %170 : vector<2x3xf32>
    %172 = arith.mulf %171, %8 : vector<2x3xf32>
    %cst_37 = arith.constant dense<0.000000e+00> : vector<2xf32>
    %173 = vector.multi_reduction <add>, %172, %cst_37 [1] : vector<2x3xf32> to vector<2xf32>
    %174 = vector.shape_cast %173 : vector<2xf32> to vector<2x1xf32>
    %175 = arith.addf %9, %174 : vector<2x1xf32>
    %cst_38 = arith.constant 0.000000e+00 : f32
    %176 = vector.broadcast %cst_38 : f32 to vector<2x1xf32>
    %177 = arith.subf %176, %175 : vector<2x1xf32>
    %178 = math.exp %177 : vector<2x1xf32>
    %cst_39 = arith.constant 1.000000e+00 : f32
    %179 = vector.broadcast %cst_39 : f32 to vector<2x1xf32>
    %180 = arith.addf %179, %178 : vector<2x1xf32>
    %181 = tpu.reciprocal %180 {approx = true} : vector<2x1xf32> -> vector<2x1xf32>
    %182 = vector.extract_strided_slice %181 {offsets = [0, 0], sizes = [1, 1], strides = [1, 1]} : vector<2x1xf32> to vector<1x1xf32>
    %183 = vector.extract_strided_slice %181 {offsets = [1, 0], sizes = [1, 1], strides = [1, 1]} : vector<2x1xf32> to vector<1x1xf32>
    %184 = arith.mulf %182, %155 : vector<1x1xf32>
    %185 = arith.mulf %183, %155 : vector<1x1xf32>
    %186 = vector.broadcast %165 : f32 to vector<1x1xf32>
    %187 = arith.minimumf %185, %186 : vector<1x1xf32>
    %188 = arith.subf %155, %184 : vector<1x1xf32>
    %189 = arith.subf %188, %187 : vector<1x1xf32>
    %190 = vector.broadcast %163 : f32 to vector<1x1xf32>
    %191 = arith.mulf %10, %190 : vector<1x1xf32>
    %192 = arith.addf %189, %191 : vector<1x1xf32>
    %193 = arith.index_cast %c4_i32 : i32 to index
    %c0_40 = arith.constant 0 : index
    %194 = vector.load %arg8[%193, %c0_40] : memref<16x128xf32, #tpu.memory_space<vmem>>, vector<1x1xf32>
    tpu.vector_store %arg8[%193, %c0_40], %192 {strides = array<i32>} : memref<16x128xf32, #tpu.memory_space<vmem>>, vector<1x1xf32>,
    %195 = arith.index_cast %c4_i32 : i32 to index
    %c1_41 = arith.constant 1 : index
    %196 = vector.load %arg8[%195, %c1_41] : memref<16x128xf32, #tpu.memory_space<vmem>>, vector<1x1xf32>
    tpu.vector_store %arg8[%195, %c1_41], %182 {strides = array<i32>} : memref<16x128xf32, #tpu.memory_space<vmem>>, vector<1x1xf32>,
    %197 = arith.index_cast %c4_i32 : i32 to index
    %c2_42 = arith.constant 2 : index
    %198 = vector.load %arg8[%197, %c2_42] : memref<16x128xf32, #tpu.memory_space<vmem>>, vector<1x1xf32>
    tpu.vector_store %arg8[%197, %c2_42], %183 {strides = array<i32>} : memref<16x128xf32, #tpu.memory_space<vmem>>, vector<1x1xf32>,
    %c5_i32 = arith.constant 5 : i32
    %199 = arith.index_cast %c5_i32 : i32 to index
    %200 = memref.load %arg1[%199] : memref<16xf32, #tpu.memory_space<smem>>
    %201 = arith.index_cast %c5_i32 : i32 to index
    %202 = memref.load %arg2[%201] : memref<16xf32, #tpu.memory_space<smem>>
    %203 = arith.subf %192, %1 : vector<1x1xf32>
    %204 = arith.mulf %203, %5 : vector<1x1xf32>
    %205 = vector.broadcast %204 : vector<1x1xf32> to vector<2x3xf32>
    %206 = arith.mulf %205, %6 : vector<2x3xf32>
    %207 = arith.addf %206, %7 : vector<2x3xf32>
    %208 = math.tanh %207 : vector<2x3xf32>
    %209 = arith.mulf %208, %8 : vector<2x3xf32>
    %cst_43 = arith.constant dense<0.000000e+00> : vector<2xf32>
    %210 = vector.multi_reduction <add>, %209, %cst_43 [1] : vector<2x3xf32> to vector<2xf32>
    %211 = vector.shape_cast %210 : vector<2xf32> to vector<2x1xf32>
    %212 = arith.addf %9, %211 : vector<2x1xf32>
    %cst_44 = arith.constant 0.000000e+00 : f32
    %213 = vector.broadcast %cst_44 : f32 to vector<2x1xf32>
    %214 = arith.subf %213, %212 : vector<2x1xf32>
    %215 = math.exp %214 : vector<2x1xf32>
    %cst_45 = arith.constant 1.000000e+00 : f32
    %216 = vector.broadcast %cst_45 : f32 to vector<2x1xf32>
    %217 = arith.addf %216, %215 : vector<2x1xf32>
    %218 = tpu.reciprocal %217 {approx = true} : vector<2x1xf32> -> vector<2x1xf32>
    %219 = vector.extract_strided_slice %218 {offsets = [0, 0], sizes = [1, 1], strides = [1, 1]} : vector<2x1xf32> to vector<1x1xf32>
    %220 = vector.extract_strided_slice %218 {offsets = [1, 0], sizes = [1, 1], strides = [1, 1]} : vector<2x1xf32> to vector<1x1xf32>
    %221 = arith.mulf %219, %192 : vector<1x1xf32>
    %222 = arith.mulf %220, %192 : vector<1x1xf32>
    %223 = vector.broadcast %202 : f32 to vector<1x1xf32>
    %224 = arith.minimumf %222, %223 : vector<1x1xf32>
    %225 = arith.subf %192, %221 : vector<1x1xf32>
    %226 = arith.subf %225, %224 : vector<1x1xf32>
    %227 = vector.broadcast %200 : f32 to vector<1x1xf32>
    %228 = arith.mulf %10, %227 : vector<1x1xf32>
    %229 = arith.addf %226, %228 : vector<1x1xf32>
    %230 = arith.index_cast %c5_i32 : i32 to index
    %c0_46 = arith.constant 0 : index
    %231 = vector.load %arg8[%230, %c0_46] : memref<16x128xf32, #tpu.memory_space<vmem>>, vector<1x1xf32>
    tpu.vector_store %arg8[%230, %c0_46], %229 {strides = array<i32>} : memref<16x128xf32, #tpu.memory_space<vmem>>, vector<1x1xf32>,
    %232 = arith.index_cast %c5_i32 : i32 to index
    %c1_47 = arith.constant 1 : index
    %233 = vector.load %arg8[%232, %c1_47] : memref<16x128xf32, #tpu.memory_space<vmem>>, vector<1x1xf32>
    tpu.vector_store %arg8[%232, %c1_47], %219 {strides = array<i32>} : memref<16x128xf32, #tpu.memory_space<vmem>>, vector<1x1xf32>,
    %234 = arith.index_cast %c5_i32 : i32 to index
    %c2_48 = arith.constant 2 : index
    %235 = vector.load %arg8[%234, %c2_48] : memref<16x128xf32, #tpu.memory_space<vmem>>, vector<1x1xf32>
    tpu.vector_store %arg8[%234, %c2_48], %220 {strides = array<i32>} : memref<16x128xf32, #tpu.memory_space<vmem>>, vector<1x1xf32>,
    %c6_i32 = arith.constant 6 : i32
    %236 = arith.index_cast %c6_i32 : i32 to index
    %237 = memref.load %arg1[%236] : memref<16xf32, #tpu.memory_space<smem>>
    %238 = arith.index_cast %c6_i32 : i32 to index
    %239 = memref.load %arg2[%238] : memref<16xf32, #tpu.memory_space<smem>>
    %240 = arith.subf %229, %1 : vector<1x1xf32>
    %241 = arith.mulf %240, %5 : vector<1x1xf32>
    %242 = vector.broadcast %241 : vector<1x1xf32> to vector<2x3xf32>
    %243 = arith.mulf %242, %6 : vector<2x3xf32>
    %244 = arith.addf %243, %7 : vector<2x3xf32>
    %245 = math.tanh %244 : vector<2x3xf32>
    %246 = arith.mulf %245, %8 : vector<2x3xf32>
    %cst_49 = arith.constant dense<0.000000e+00> : vector<2xf32>
    %247 = vector.multi_reduction <add>, %246, %cst_49 [1] : vector<2x3xf32> to vector<2xf32>
    %248 = vector.shape_cast %247 : vector<2xf32> to vector<2x1xf32>
    %249 = arith.addf %9, %248 : vector<2x1xf32>
    %cst_50 = arith.constant 0.000000e+00 : f32
    %250 = vector.broadcast %cst_50 : f32 to vector<2x1xf32>
    %251 = arith.subf %250, %249 : vector<2x1xf32>
    %252 = math.exp %251 : vector<2x1xf32>
    %cst_51 = arith.constant 1.000000e+00 : f32
    %253 = vector.broadcast %cst_51 : f32 to vector<2x1xf32>
    %254 = arith.addf %253, %252 : vector<2x1xf32>
    %255 = tpu.reciprocal %254 {approx = true} : vector<2x1xf32> -> vector<2x1xf32>
    %256 = vector.extract_strided_slice %255 {offsets = [0, 0], sizes = [1, 1], strides = [1, 1]} : vector<2x1xf32> to vector<1x1xf32>
    %257 = vector.extract_strided_slice %255 {offsets = [1, 0], sizes = [1, 1], strides = [1, 1]} : vector<2x1xf32> to vector<1x1xf32>
    %258 = arith.mulf %256, %229 : vector<1x1xf32>
    %259 = arith.mulf %257, %229 : vector<1x1xf32>
    %260 = vector.broadcast %239 : f32 to vector<1x1xf32>
    %261 = arith.minimumf %259, %260 : vector<1x1xf32>
    %262 = arith.subf %229, %258 : vector<1x1xf32>
    %263 = arith.subf %262, %261 : vector<1x1xf32>
    %264 = vector.broadcast %237 : f32 to vector<1x1xf32>
    %265 = arith.mulf %10, %264 : vector<1x1xf32>
    %266 = arith.addf %263, %265 : vector<1x1xf32>
    %267 = arith.index_cast %c6_i32 : i32 to index
    %c0_52 = arith.constant 0 : index
    %268 = vector.load %arg8[%267, %c0_52] : memref<16x128xf32, #tpu.memory_space<vmem>>, vector<1x1xf32>
    tpu.vector_store %arg8[%267, %c0_52], %266 {strides = array<i32>} : memref<16x128xf32, #tpu.memory_space<vmem>>, vector<1x1xf32>,
    %269 = arith.index_cast %c6_i32 : i32 to index
    %c1_53 = arith.constant 1 : index
    %270 = vector.load %arg8[%269, %c1_53] : memref<16x128xf32, #tpu.memory_space<vmem>>, vector<1x1xf32>
    tpu.vector_store %arg8[%269, %c1_53], %256 {strides = array<i32>} : memref<16x128xf32, #tpu.memory_space<vmem>>, vector<1x1xf32>,
    %271 = arith.index_cast %c6_i32 : i32 to index
    %c2_54 = arith.constant 2 : index
    %272 = vector.load %arg8[%271, %c2_54] : memref<16x128xf32, #tpu.memory_space<vmem>>, vector<1x1xf32>
    tpu.vector_store %arg8[%271, %c2_54], %257 {strides = array<i32>} : memref<16x128xf32, #tpu.memory_space<vmem>>, vector<1x1xf32>,
    %c7_i32 = arith.constant 7 : i32
    %273 = arith.index_cast %c7_i32 : i32 to index
    %274 = memref.load %arg1[%273] : memref<16xf32, #tpu.memory_space<smem>>
    %275 = arith.index_cast %c7_i32 : i32 to index
    %276 = memref.load %arg2[%275] : memref<16xf32, #tpu.memory_space<smem>>
    %277 = arith.subf %266, %1 : vector<1x1xf32>
    %278 = arith.mulf %277, %5 : vector<1x1xf32>
    %279 = vector.broadcast %278 : vector<1x1xf32> to vector<2x3xf32>
    %280 = arith.mulf %279, %6 : vector<2x3xf32>
    %281 = arith.addf %280, %7 : vector<2x3xf32>
    %282 = math.tanh %281 : vector<2x3xf32>
    %283 = arith.mulf %282, %8 : vector<2x3xf32>
    %cst_55 = arith.constant dense<0.000000e+00> : vector<2xf32>
    %284 = vector.multi_reduction <add>, %283, %cst_55 [1] : vector<2x3xf32> to vector<2xf32>
    %285 = vector.shape_cast %284 : vector<2xf32> to vector<2x1xf32>
    %286 = arith.addf %9, %285 : vector<2x1xf32>
    %cst_56 = arith.constant 0.000000e+00 : f32
    %287 = vector.broadcast %cst_56 : f32 to vector<2x1xf32>
    %288 = arith.subf %287, %286 : vector<2x1xf32>
    %289 = math.exp %288 : vector<2x1xf32>
    %cst_57 = arith.constant 1.000000e+00 : f32
    %290 = vector.broadcast %cst_57 : f32 to vector<2x1xf32>
    %291 = arith.addf %290, %289 : vector<2x1xf32>
    %292 = tpu.reciprocal %291 {approx = true} : vector<2x1xf32> -> vector<2x1xf32>
    %293 = vector.extract_strided_slice %292 {offsets = [0, 0], sizes = [1, 1], strides = [1, 1]} : vector<2x1xf32> to vector<1x1xf32>
    %294 = vector.extract_strided_slice %292 {offsets = [1, 0], sizes = [1, 1], strides = [1, 1]} : vector<2x1xf32> to vector<1x1xf32>
    %295 = arith.mulf %293, %266 : vector<1x1xf32>
    %296 = arith.mulf %294, %266 : vector<1x1xf32>
    %297 = vector.broadcast %276 : f32 to vector<1x1xf32>
    %298 = arith.minimumf %296, %297 : vector<1x1xf32>
    %299 = arith.subf %266, %295 : vector<1x1xf32>
    %300 = arith.subf %299, %298 : vector<1x1xf32>
    %301 = vector.broadcast %274 : f32 to vector<1x1xf32>
    %302 = arith.mulf %10, %301 : vector<1x1xf32>
    %303 = arith.addf %300, %302 : vector<1x1xf32>
    %304 = arith.index_cast %c7_i32 : i32 to index
    %c0_58 = arith.constant 0 : index
    %305 = vector.load %arg8[%304, %c0_58] : memref<16x128xf32, #tpu.memory_space<vmem>>, vector<1x1xf32>
    tpu.vector_store %arg8[%304, %c0_58], %303 {strides = array<i32>} : memref<16x128xf32, #tpu.memory_space<vmem>>, vector<1x1xf32>,
    %306 = arith.index_cast %c7_i32 : i32 to index
    %c1_59 = arith.constant 1 : index
    %307 = vector.load %arg8[%306, %c1_59] : memref<16x128xf32, #tpu.memory_space<vmem>>, vector<1x1xf32>
    tpu.vector_store %arg8[%306, %c1_59], %293 {strides = array<i32>} : memref<16x128xf32, #tpu.memory_space<vmem>>, vector<1x1xf32>,
    %308 = arith.index_cast %c7_i32 : i32 to index
    %c2_60 = arith.constant 2 : index
    %309 = vector.load %arg8[%308, %c2_60] : memref<16x128xf32, #tpu.memory_space<vmem>>, vector<1x1xf32>
    tpu.vector_store %arg8[%308, %c2_60], %294 {strides = array<i32>} : memref<16x128xf32, #tpu.memory_space<vmem>>, vector<1x1xf32>,
    %c8_i32 = arith.constant 8 : i32
    %310 = arith.index_cast %c8_i32 : i32 to index
    %311 = memref.load %arg1[%310] : memref<16xf32, #tpu.memory_space<smem>>
    %312 = arith.index_cast %c8_i32 : i32 to index
    %313 = memref.load %arg2[%312] : memref<16xf32, #tpu.memory_space<smem>>
    %314 = arith.subf %303, %1 : vector<1x1xf32>
    %315 = arith.mulf %314, %5 : vector<1x1xf32>
    %316 = vector.broadcast %315 : vector<1x1xf32> to vector<2x3xf32>
    %317 = arith.mulf %316, %6 : vector<2x3xf32>
    %318 = arith.addf %317, %7 : vector<2x3xf32>
    %319 = math.tanh %318 : vector<2x3xf32>
    %320 = arith.mulf %319, %8 : vector<2x3xf32>
    %cst_61 = arith.constant dense<0.000000e+00> : vector<2xf32>
    %321 = vector.multi_reduction <add>, %320, %cst_61 [1] : vector<2x3xf32> to vector<2xf32>
    %322 = vector.shape_cast %321 : vector<2xf32> to vector<2x1xf32>
    %323 = arith.addf %9, %322 : vector<2x1xf32>
    %cst_62 = arith.constant 0.000000e+00 : f32
    %324 = vector.broadcast %cst_62 : f32 to vector<2x1xf32>
    %325 = arith.subf %324, %323 : vector<2x1xf32>
    %326 = math.exp %325 : vector<2x1xf32>
    %cst_63 = arith.constant 1.000000e+00 : f32
    %327 = vector.broadcast %cst_63 : f32 to vector<2x1xf32>
    %328 = arith.addf %327, %326 : vector<2x1xf32>
    %329 = tpu.reciprocal %328 {approx = true} : vector<2x1xf32> -> vector<2x1xf32>
    %330 = vector.extract_strided_slice %329 {offsets = [0, 0], sizes = [1, 1], strides = [1, 1]} : vector<2x1xf32> to vector<1x1xf32>
    %331 = vector.extract_strided_slice %329 {offsets = [1, 0], sizes = [1, 1], strides = [1, 1]} : vector<2x1xf32> to vector<1x1xf32>
    %332 = arith.mulf %330, %303 : vector<1x1xf32>
    %333 = arith.mulf %331, %303 : vector<1x1xf32>
    %334 = vector.broadcast %313 : f32 to vector<1x1xf32>
    %335 = arith.minimumf %333, %334 : vector<1x1xf32>
    %336 = arith.subf %303, %332 : vector<1x1xf32>
    %337 = arith.subf %336, %335 : vector<1x1xf32>
    %338 = vector.broadcast %311 : f32 to vector<1x1xf32>
    %339 = arith.mulf %10, %338 : vector<1x1xf32>
    %340 = arith.addf %337, %339 : vector<1x1xf32>
    %341 = arith.index_cast %c8_i32 : i32 to index
    %c0_64 = arith.constant 0 : index
    %342 = vector.load %arg8[%341, %c0_64] : memref<16x128xf32, #tpu.memory_space<vmem>>, vector<1x1xf32>
    tpu.vector_store %arg8[%341, %c0_64], %340 {strides = array<i32>} : memref<16x128xf32, #tpu.memory_space<vmem>>, vector<1x1xf32>,
    %343 = arith.index_cast %c8_i32 : i32 to index
    %c1_65 = arith.constant 1 : index
    %344 = vector.load %arg8[%343, %c1_65] : memref<16x128xf32, #tpu.memory_space<vmem>>, vector<1x1xf32>
    tpu.vector_store %arg8[%343, %c1_65], %330 {strides = array<i32>} : memref<16x128xf32, #tpu.memory_space<vmem>>, vector<1x1xf32>,
    %345 = arith.index_cast %c8_i32 : i32 to index
    %c2_66 = arith.constant 2 : index
    %346 = vector.load %arg8[%345, %c2_66] : memref<16x128xf32, #tpu.memory_space<vmem>>, vector<1x1xf32>
    tpu.vector_store %arg8[%345, %c2_66], %331 {strides = array<i32>} : memref<16x128xf32, #tpu.memory_space<vmem>>, vector<1x1xf32>,
    %c9_i32 = arith.constant 9 : i32
    %347 = arith.index_cast %c9_i32 : i32 to index
    %348 = memref.load %arg1[%347] : memref<16xf32, #tpu.memory_space<smem>>
    %349 = arith.index_cast %c9_i32 : i32 to index
    %350 = memref.load %arg2[%349] : memref<16xf32, #tpu.memory_space<smem>>
    %351 = arith.subf %340, %1 : vector<1x1xf32>
    %352 = arith.mulf %351, %5 : vector<1x1xf32>
    %353 = vector.broadcast %352 : vector<1x1xf32> to vector<2x3xf32>
    %354 = arith.mulf %353, %6 : vector<2x3xf32>
    %355 = arith.addf %354, %7 : vector<2x3xf32>
    %356 = math.tanh %355 : vector<2x3xf32>
    %357 = arith.mulf %356, %8 : vector<2x3xf32>
    %cst_67 = arith.constant dense<0.000000e+00> : vector<2xf32>
    %358 = vector.multi_reduction <add>, %357, %cst_67 [1] : vector<2x3xf32> to vector<2xf32>
    %359 = vector.shape_cast %358 : vector<2xf32> to vector<2x1xf32>
    %360 = arith.addf %9, %359 : vector<2x1xf32>
    %cst_68 = arith.constant 0.000000e+00 : f32
    %361 = vector.broadcast %cst_68 : f32 to vector<2x1xf32>
    %362 = arith.subf %361, %360 : vector<2x1xf32>
    %363 = math.exp %362 : vector<2x1xf32>
    %cst_69 = arith.constant 1.000000e+00 : f32
    %364 = vector.broadcast %cst_69 : f32 to vector<2x1xf32>
    %365 = arith.addf %364, %363 : vector<2x1xf32>
    %366 = tpu.reciprocal %365 {approx = true} : vector<2x1xf32> -> vector<2x1xf32>
    %367 = vector.extract_strided_slice %366 {offsets = [0, 0], sizes = [1, 1], strides = [1, 1]} : vector<2x1xf32> to vector<1x1xf32>
    %368 = vector.extract_strided_slice %366 {offsets = [1, 0], sizes = [1, 1], strides = [1, 1]} : vector<2x1xf32> to vector<1x1xf32>
    %369 = arith.mulf %367, %340 : vector<1x1xf32>
    %370 = arith.mulf %368, %340 : vector<1x1xf32>
    %371 = vector.broadcast %350 : f32 to vector<1x1xf32>
    %372 = arith.minimumf %370, %371 : vector<1x1xf32>
    %373 = arith.subf %340, %369 : vector<1x1xf32>
    %374 = arith.subf %373, %372 : vector<1x1xf32>
    %375 = vector.broadcast %348 : f32 to vector<1x1xf32>
    %376 = arith.mulf %10, %375 : vector<1x1xf32>
    %377 = arith.addf %374, %376 : vector<1x1xf32>
    %378 = arith.index_cast %c9_i32 : i32 to index
    %c0_70 = arith.constant 0 : index
    %379 = vector.load %arg8[%378, %c0_70] : memref<16x128xf32, #tpu.memory_space<vmem>>, vector<1x1xf32>
    tpu.vector_store %arg8[%378, %c0_70], %377 {strides = array<i32>} : memref<16x128xf32, #tpu.memory_space<vmem>>, vector<1x1xf32>,
    %380 = arith.index_cast %c9_i32 : i32 to index
    %c1_71 = arith.constant 1 : index
    %381 = vector.load %arg8[%380, %c1_71] : memref<16x128xf32, #tpu.memory_space<vmem>>, vector<1x1xf32>
    tpu.vector_store %arg8[%380, %c1_71], %367 {strides = array<i32>} : memref<16x128xf32, #tpu.memory_space<vmem>>, vector<1x1xf32>,
    %382 = arith.index_cast %c9_i32 : i32 to index
    %c2_72 = arith.constant 2 : index
    %383 = vector.load %arg8[%382, %c2_72] : memref<16x128xf32, #tpu.memory_space<vmem>>, vector<1x1xf32>
    tpu.vector_store %arg8[%382, %c2_72], %368 {strides = array<i32>} : memref<16x128xf32, #tpu.memory_space<vmem>>, vector<1x1xf32>,
    %c10_i32 = arith.constant 10 : i32
    %384 = arith.index_cast %c10_i32 : i32 to index
    %385 = memref.load %arg1[%384] : memref<16xf32, #tpu.memory_space<smem>>
    %386 = arith.index_cast %c10_i32 : i32 to index
    %387 = memref.load %arg2[%386] : memref<16xf32, #tpu.memory_space<smem>>
    %388 = arith.subf %377, %1 : vector<1x1xf32>
    %389 = arith.mulf %388, %5 : vector<1x1xf32>
    %390 = vector.broadcast %389 : vector<1x1xf32> to vector<2x3xf32>
    %391 = arith.mulf %390, %6 : vector<2x3xf32>
    %392 = arith.addf %391, %7 : vector<2x3xf32>
    %393 = math.tanh %392 : vector<2x3xf32>
    %394 = arith.mulf %393, %8 : vector<2x3xf32>
    %cst_73 = arith.constant dense<0.000000e+00> : vector<2xf32>
    %395 = vector.multi_reduction <add>, %394, %cst_73 [1] : vector<2x3xf32> to vector<2xf32>
    %396 = vector.shape_cast %395 : vector<2xf32> to vector<2x1xf32>
    %397 = arith.addf %9, %396 : vector<2x1xf32>
    %cst_74 = arith.constant 0.000000e+00 : f32
    %398 = vector.broadcast %cst_74 : f32 to vector<2x1xf32>
    %399 = arith.subf %398, %397 : vector<2x1xf32>
    %400 = math.exp %399 : vector<2x1xf32>
    %cst_75 = arith.constant 1.000000e+00 : f32
    %401 = vector.broadcast %cst_75 : f32 to vector<2x1xf32>
    %402 = arith.addf %401, %400 : vector<2x1xf32>
    %403 = tpu.reciprocal %402 {approx = true} : vector<2x1xf32> -> vector<2x1xf32>
    %404 = vector.extract_strided_slice %403 {offsets = [0, 0], sizes = [1, 1], strides = [1, 1]} : vector<2x1xf32> to vector<1x1xf32>
    %405 = vector.extract_strided_slice %403 {offsets = [1, 0], sizes = [1, 1], strides = [1, 1]} : vector<2x1xf32> to vector<1x1xf32>
    %406 = arith.mulf %404, %377 : vector<1x1xf32>
    %407 = arith.mulf %405, %377 : vector<1x1xf32>
    %408 = vector.broadcast %387 : f32 to vector<1x1xf32>
    %409 = arith.minimumf %407, %408 : vector<1x1xf32>
    %410 = arith.subf %377, %406 : vector<1x1xf32>
    %411 = arith.subf %410, %409 : vector<1x1xf32>
    %412 = vector.broadcast %385 : f32 to vector<1x1xf32>
    %413 = arith.mulf %10, %412 : vector<1x1xf32>
    %414 = arith.addf %411, %413 : vector<1x1xf32>
    %415 = arith.index_cast %c10_i32 : i32 to index
    %c0_76 = arith.constant 0 : index
    %416 = vector.load %arg8[%415, %c0_76] : memref<16x128xf32, #tpu.memory_space<vmem>>, vector<1x1xf32>
    tpu.vector_store %arg8[%415, %c0_76], %414 {strides = array<i32>} : memref<16x128xf32, #tpu.memory_space<vmem>>, vector<1x1xf32>,
    %417 = arith.index_cast %c10_i32 : i32 to index
    %c1_77 = arith.constant 1 : index
    %418 = vector.load %arg8[%417, %c1_77] : memref<16x128xf32, #tpu.memory_space<vmem>>, vector<1x1xf32>
    tpu.vector_store %arg8[%417, %c1_77], %404 {strides = array<i32>} : memref<16x128xf32, #tpu.memory_space<vmem>>, vector<1x1xf32>,
    %419 = arith.index_cast %c10_i32 : i32 to index
    %c2_78 = arith.constant 2 : index
    %420 = vector.load %arg8[%419, %c2_78] : memref<16x128xf32, #tpu.memory_space<vmem>>, vector<1x1xf32>
    tpu.vector_store %arg8[%419, %c2_78], %405 {strides = array<i32>} : memref<16x128xf32, #tpu.memory_space<vmem>>, vector<1x1xf32>,
    %c11_i32 = arith.constant 11 : i32
    %421 = arith.index_cast %c11_i32 : i32 to index
    %422 = memref.load %arg1[%421] : memref<16xf32, #tpu.memory_space<smem>>
    %423 = arith.index_cast %c11_i32 : i32 to index
    %424 = memref.load %arg2[%423] : memref<16xf32, #tpu.memory_space<smem>>
    %425 = arith.subf %414, %1 : vector<1x1xf32>
    %426 = arith.mulf %425, %5 : vector<1x1xf32>
    %427 = vector.broadcast %426 : vector<1x1xf32> to vector<2x3xf32>
    %428 = arith.mulf %427, %6 : vector<2x3xf32>
    %429 = arith.addf %428, %7 : vector<2x3xf32>
    %430 = math.tanh %429 : vector<2x3xf32>
    %431 = arith.mulf %430, %8 : vector<2x3xf32>
    %cst_79 = arith.constant dense<0.000000e+00> : vector<2xf32>
    %432 = vector.multi_reduction <add>, %431, %cst_79 [1] : vector<2x3xf32> to vector<2xf32>
    %433 = vector.shape_cast %432 : vector<2xf32> to vector<2x1xf32>
    %434 = arith.addf %9, %433 : vector<2x1xf32>
    %cst_80 = arith.constant 0.000000e+00 : f32
    %435 = vector.broadcast %cst_80 : f32 to vector<2x1xf32>
    %436 = arith.subf %435, %434 : vector<2x1xf32>
    %437 = math.exp %436 : vector<2x1xf32>
    %cst_81 = arith.constant 1.000000e+00 : f32
    %438 = vector.broadcast %cst_81 : f32 to vector<2x1xf32>
    %439 = arith.addf %438, %437 : vector<2x1xf32>
    %440 = tpu.reciprocal %439 {approx = true} : vector<2x1xf32> -> vector<2x1xf32>
    %441 = vector.extract_strided_slice %440 {offsets = [0, 0], sizes = [1, 1], strides = [1, 1]} : vector<2x1xf32> to vector<1x1xf32>
    %442 = vector.extract_strided_slice %440 {offsets = [1, 0], sizes = [1, 1], strides = [1, 1]} : vector<2x1xf32> to vector<1x1xf32>
    %443 = arith.mulf %441, %414 : vector<1x1xf32>
    %444 = arith.mulf %442, %414 : vector<1x1xf32>
    %445 = vector.broadcast %424 : f32 to vector<1x1xf32>
    %446 = arith.minimumf %444, %445 : vector<1x1xf32>
    %447 = arith.subf %414, %443 : vector<1x1xf32>
    %448 = arith.subf %447, %446 : vector<1x1xf32>
    %449 = vector.broadcast %422 : f32 to vector<1x1xf32>
    %450 = arith.mulf %10, %449 : vector<1x1xf32>
    %451 = arith.addf %448, %450 : vector<1x1xf32>
    %452 = arith.index_cast %c11_i32 : i32 to index
    %c0_82 = arith.constant 0 : index
    %453 = vector.load %arg8[%452, %c0_82] : memref<16x128xf32, #tpu.memory_space<vmem>>, vector<1x1xf32>
    tpu.vector_store %arg8[%452, %c0_82], %451 {strides = array<i32>} : memref<16x128xf32, #tpu.memory_space<vmem>>, vector<1x1xf32>,
    %454 = arith.index_cast %c11_i32 : i32 to index
    %c1_83 = arith.constant 1 : index
    %455 = vector.load %arg8[%454, %c1_83] : memref<16x128xf32, #tpu.memory_space<vmem>>, vector<1x1xf32>
    tpu.vector_store %arg8[%454, %c1_83], %441 {strides = array<i32>} : memref<16x128xf32, #tpu.memory_space<vmem>>, vector<1x1xf32>,
    %456 = arith.index_cast %c11_i32 : i32 to index
    %c2_84 = arith.constant 2 : index
    %457 = vector.load %arg8[%456, %c2_84] : memref<16x128xf32, #tpu.memory_space<vmem>>, vector<1x1xf32>
    tpu.vector_store %arg8[%456, %c2_84], %442 {strides = array<i32>} : memref<16x128xf32, #tpu.memory_space<vmem>>, vector<1x1xf32>,
    %c12_i32 = arith.constant 12 : i32
    %458 = arith.index_cast %c12_i32 : i32 to index
    %459 = memref.load %arg1[%458] : memref<16xf32, #tpu.memory_space<smem>>
    %460 = arith.index_cast %c12_i32 : i32 to index
    %461 = memref.load %arg2[%460] : memref<16xf32, #tpu.memory_space<smem>>
    %462 = arith.subf %451, %1 : vector<1x1xf32>
    %463 = arith.mulf %462, %5 : vector<1x1xf32>
    %464 = vector.broadcast %463 : vector<1x1xf32> to vector<2x3xf32>
    %465 = arith.mulf %464, %6 : vector<2x3xf32>
    %466 = arith.addf %465, %7 : vector<2x3xf32>
    %467 = math.tanh %466 : vector<2x3xf32>
    %468 = arith.mulf %467, %8 : vector<2x3xf32>
    %cst_85 = arith.constant dense<0.000000e+00> : vector<2xf32>
    %469 = vector.multi_reduction <add>, %468, %cst_85 [1] : vector<2x3xf32> to vector<2xf32>
    %470 = vector.shape_cast %469 : vector<2xf32> to vector<2x1xf32>
    %471 = arith.addf %9, %470 : vector<2x1xf32>
    %cst_86 = arith.constant 0.000000e+00 : f32
    %472 = vector.broadcast %cst_86 : f32 to vector<2x1xf32>
    %473 = arith.subf %472, %471 : vector<2x1xf32>
    %474 = math.exp %473 : vector<2x1xf32>
    %cst_87 = arith.constant 1.000000e+00 : f32
    %475 = vector.broadcast %cst_87 : f32 to vector<2x1xf32>
    %476 = arith.addf %475, %474 : vector<2x1xf32>
    %477 = tpu.reciprocal %476 {approx = true} : vector<2x1xf32> -> vector<2x1xf32>
    %478 = vector.extract_strided_slice %477 {offsets = [0, 0], sizes = [1, 1], strides = [1, 1]} : vector<2x1xf32> to vector<1x1xf32>
    %479 = vector.extract_strided_slice %477 {offsets = [1, 0], sizes = [1, 1], strides = [1, 1]} : vector<2x1xf32> to vector<1x1xf32>
    %480 = arith.mulf %478, %451 : vector<1x1xf32>
    %481 = arith.mulf %479, %451 : vector<1x1xf32>
    %482 = vector.broadcast %461 : f32 to vector<1x1xf32>
    %483 = arith.minimumf %481, %482 : vector<1x1xf32>
    %484 = arith.subf %451, %480 : vector<1x1xf32>
    %485 = arith.subf %484, %483 : vector<1x1xf32>
    %486 = vector.broadcast %459 : f32 to vector<1x1xf32>
    %487 = arith.mulf %10, %486 : vector<1x1xf32>
    %488 = arith.addf %485, %487 : vector<1x1xf32>
    %489 = arith.index_cast %c12_i32 : i32 to index
    %c0_88 = arith.constant 0 : index
    %490 = vector.load %arg8[%489, %c0_88] : memref<16x128xf32, #tpu.memory_space<vmem>>, vector<1x1xf32>
    tpu.vector_store %arg8[%489, %c0_88], %488 {strides = array<i32>} : memref<16x128xf32, #tpu.memory_space<vmem>>, vector<1x1xf32>,
    %491 = arith.index_cast %c12_i32 : i32 to index
    %c1_89 = arith.constant 1 : index
    %492 = vector.load %arg8[%491, %c1_89] : memref<16x128xf32, #tpu.memory_space<vmem>>, vector<1x1xf32>
    tpu.vector_store %arg8[%491, %c1_89], %478 {strides = array<i32>} : memref<16x128xf32, #tpu.memory_space<vmem>>, vector<1x1xf32>,
    %493 = arith.index_cast %c12_i32 : i32 to index
    %c2_90 = arith.constant 2 : index
    %494 = vector.load %arg8[%493, %c2_90] : memref<16x128xf32, #tpu.memory_space<vmem>>, vector<1x1xf32>
    tpu.vector_store %arg8[%493, %c2_90], %479 {strides = array<i32>} : memref<16x128xf32, #tpu.memory_space<vmem>>, vector<1x1xf32>,
    %c13_i32 = arith.constant 13 : i32
    %495 = arith.index_cast %c13_i32 : i32 to index
    %496 = memref.load %arg1[%495] : memref<16xf32, #tpu.memory_space<smem>>
    %497 = arith.index_cast %c13_i32 : i32 to index
    %498 = memref.load %arg2[%497] : memref<16xf32, #tpu.memory_space<smem>>
    %499 = arith.subf %488, %1 : vector<1x1xf32>
    %500 = arith.mulf %499, %5 : vector<1x1xf32>
    %501 = vector.broadcast %500 : vector<1x1xf32> to vector<2x3xf32>
    %502 = arith.mulf %501, %6 : vector<2x3xf32>
    %503 = arith.addf %502, %7 : vector<2x3xf32>
    %504 = math.tanh %503 : vector<2x3xf32>
    %505 = arith.mulf %504, %8 : vector<2x3xf32>
    %cst_91 = arith.constant dense<0.000000e+00> : vector<2xf32>
    %506 = vector.multi_reduction <add>, %505, %cst_91 [1] : vector<2x3xf32> to vector<2xf32>
    %507 = vector.shape_cast %506 : vector<2xf32> to vector<2x1xf32>
    %508 = arith.addf %9, %507 : vector<2x1xf32>
    %cst_92 = arith.constant 0.000000e+00 : f32
    %509 = vector.broadcast %cst_92 : f32 to vector<2x1xf32>
    %510 = arith.subf %509, %508 : vector<2x1xf32>
    %511 = math.exp %510 : vector<2x1xf32>
    %cst_93 = arith.constant 1.000000e+00 : f32
    %512 = vector.broadcast %cst_93 : f32 to vector<2x1xf32>
    %513 = arith.addf %512, %511 : vector<2x1xf32>
    %514 = tpu.reciprocal %513 {approx = true} : vector<2x1xf32> -> vector<2x1xf32>
    %515 = vector.extract_strided_slice %514 {offsets = [0, 0], sizes = [1, 1], strides = [1, 1]} : vector<2x1xf32> to vector<1x1xf32>
    %516 = vector.extract_strided_slice %514 {offsets = [1, 0], sizes = [1, 1], strides = [1, 1]} : vector<2x1xf32> to vector<1x1xf32>
    %517 = arith.mulf %515, %488 : vector<1x1xf32>
    %518 = arith.mulf %516, %488 : vector<1x1xf32>
    %519 = vector.broadcast %498 : f32 to vector<1x1xf32>
    %520 = arith.minimumf %518, %519 : vector<1x1xf32>
    %521 = arith.subf %488, %517 : vector<1x1xf32>
    %522 = arith.subf %521, %520 : vector<1x1xf32>
    %523 = vector.broadcast %496 : f32 to vector<1x1xf32>
    %524 = arith.mulf %10, %523 : vector<1x1xf32>
    %525 = arith.addf %522, %524 : vector<1x1xf32>
    %526 = arith.index_cast %c13_i32 : i32 to index
    %c0_94 = arith.constant 0 : index
    %527 = vector.load %arg8[%526, %c0_94] : memref<16x128xf32, #tpu.memory_space<vmem>>, vector<1x1xf32>
    tpu.vector_store %arg8[%526, %c0_94], %525 {strides = array<i32>} : memref<16x128xf32, #tpu.memory_space<vmem>>, vector<1x1xf32>,
    %528 = arith.index_cast %c13_i32 : i32 to index
    %c1_95 = arith.constant 1 : index
    %529 = vector.load %arg8[%528, %c1_95] : memref<16x128xf32, #tpu.memory_space<vmem>>, vector<1x1xf32>
    tpu.vector_store %arg8[%528, %c1_95], %515 {strides = array<i32>} : memref<16x128xf32, #tpu.memory_space<vmem>>, vector<1x1xf32>,
    %530 = arith.index_cast %c13_i32 : i32 to index
    %c2_96 = arith.constant 2 : index
    %531 = vector.load %arg8[%530, %c2_96] : memref<16x128xf32, #tpu.memory_space<vmem>>, vector<1x1xf32>
    tpu.vector_store %arg8[%530, %c2_96], %516 {strides = array<i32>} : memref<16x128xf32, #tpu.memory_space<vmem>>, vector<1x1xf32>,
    %c14_i32 = arith.constant 14 : i32
    %532 = arith.index_cast %c14_i32 : i32 to index
    %533 = memref.load %arg1[%532] : memref<16xf32, #tpu.memory_space<smem>>
    %534 = arith.index_cast %c14_i32 : i32 to index
    %535 = memref.load %arg2[%534] : memref<16xf32, #tpu.memory_space<smem>>
    %536 = arith.subf %525, %1 : vector<1x1xf32>
    %537 = arith.mulf %536, %5 : vector<1x1xf32>
    %538 = vector.broadcast %537 : vector<1x1xf32> to vector<2x3xf32>
    %539 = arith.mulf %538, %6 : vector<2x3xf32>
    %540 = arith.addf %539, %7 : vector<2x3xf32>
    %541 = math.tanh %540 : vector<2x3xf32>
    %542 = arith.mulf %541, %8 : vector<2x3xf32>
    %cst_97 = arith.constant dense<0.000000e+00> : vector<2xf32>
    %543 = vector.multi_reduction <add>, %542, %cst_97 [1] : vector<2x3xf32> to vector<2xf32>
    %544 = vector.shape_cast %543 : vector<2xf32> to vector<2x1xf32>
    %545 = arith.addf %9, %544 : vector<2x1xf32>
    %cst_98 = arith.constant 0.000000e+00 : f32
    %546 = vector.broadcast %cst_98 : f32 to vector<2x1xf32>
    %547 = arith.subf %546, %545 : vector<2x1xf32>
    %548 = math.exp %547 : vector<2x1xf32>
    %cst_99 = arith.constant 1.000000e+00 : f32
    %549 = vector.broadcast %cst_99 : f32 to vector<2x1xf32>
    %550 = arith.addf %549, %548 : vector<2x1xf32>
    %551 = tpu.reciprocal %550 {approx = true} : vector<2x1xf32> -> vector<2x1xf32>
    %552 = vector.extract_strided_slice %551 {offsets = [0, 0], sizes = [1, 1], strides = [1, 1]} : vector<2x1xf32> to vector<1x1xf32>
    %553 = vector.extract_strided_slice %551 {offsets = [1, 0], sizes = [1, 1], strides = [1, 1]} : vector<2x1xf32> to vector<1x1xf32>
    %554 = arith.mulf %552, %525 : vector<1x1xf32>
    %555 = arith.mulf %553, %525 : vector<1x1xf32>
    %556 = vector.broadcast %535 : f32 to vector<1x1xf32>
    %557 = arith.minimumf %555, %556 : vector<1x1xf32>
    %558 = arith.subf %525, %554 : vector<1x1xf32>
    %559 = arith.subf %558, %557 : vector<1x1xf32>
    %560 = vector.broadcast %533 : f32 to vector<1x1xf32>
    %561 = arith.mulf %10, %560 : vector<1x1xf32>
    %562 = arith.addf %559, %561 : vector<1x1xf32>
    %563 = arith.index_cast %c14_i32 : i32 to index
    %c0_100 = arith.constant 0 : index
    %564 = vector.load %arg8[%563, %c0_100] : memref<16x128xf32, #tpu.memory_space<vmem>>, vector<1x1xf32>
    tpu.vector_store %arg8[%563, %c0_100], %562 {strides = array<i32>} : memref<16x128xf32, #tpu.memory_space<vmem>>, vector<1x1xf32>,
    %565 = arith.index_cast %c14_i32 : i32 to index
    %c1_101 = arith.constant 1 : index
    %566 = vector.load %arg8[%565, %c1_101] : memref<16x128xf32, #tpu.memory_space<vmem>>, vector<1x1xf32>
    tpu.vector_store %arg8[%565, %c1_101], %552 {strides = array<i32>} : memref<16x128xf32, #tpu.memory_space<vmem>>, vector<1x1xf32>,
    %567 = arith.index_cast %c14_i32 : i32 to index
    %c2_102 = arith.constant 2 : index
    %568 = vector.load %arg8[%567, %c2_102] : memref<16x128xf32, #tpu.memory_space<vmem>>, vector<1x1xf32>
    tpu.vector_store %arg8[%567, %c2_102], %553 {strides = array<i32>} : memref<16x128xf32, #tpu.memory_space<vmem>>, vector<1x1xf32>,
    %c15_i32 = arith.constant 15 : i32
    %569 = arith.index_cast %c15_i32 : i32 to index
    %570 = memref.load %arg1[%569] : memref<16xf32, #tpu.memory_space<smem>>
    %571 = arith.index_cast %c15_i32 : i32 to index
    %572 = memref.load %arg2[%571] : memref<16xf32, #tpu.memory_space<smem>>
    %573 = arith.subf %562, %1 : vector<1x1xf32>
    %574 = arith.mulf %573, %5 : vector<1x1xf32>
    %575 = vector.broadcast %574 : vector<1x1xf32> to vector<2x3xf32>
    %576 = arith.mulf %575, %6 : vector<2x3xf32>
    %577 = arith.addf %576, %7 : vector<2x3xf32>
    %578 = math.tanh %577 : vector<2x3xf32>
    %579 = arith.mulf %578, %8 : vector<2x3xf32>
    %cst_103 = arith.constant dense<0.000000e+00> : vector<2xf32>
    %580 = vector.multi_reduction <add>, %579, %cst_103 [1] : vector<2x3xf32> to vector<2xf32>
    %581 = vector.shape_cast %580 : vector<2xf32> to vector<2x1xf32>
    %582 = arith.addf %9, %581 : vector<2x1xf32>
    %cst_104 = arith.constant 0.000000e+00 : f32
    %583 = vector.broadcast %cst_104 : f32 to vector<2x1xf32>
    %584 = arith.subf %583, %582 : vector<2x1xf32>
    %585 = math.exp %584 : vector<2x1xf32>
    %cst_105 = arith.constant 1.000000e+00 : f32
    %586 = vector.broadcast %cst_105 : f32 to vector<2x1xf32>
    %587 = arith.addf %586, %585 : vector<2x1xf32>
    %588 = tpu.reciprocal %587 {approx = true} : vector<2x1xf32> -> vector<2x1xf32>
    %589 = vector.extract_strided_slice %588 {offsets = [0, 0], sizes = [1, 1], strides = [1, 1]} : vector<2x1xf32> to vector<1x1xf32>
    %590 = vector.extract_strided_slice %588 {offsets = [1, 0], sizes = [1, 1], strides = [1, 1]} : vector<2x1xf32> to vector<1x1xf32>
    %591 = arith.mulf %589, %562 : vector<1x1xf32>
    %592 = arith.mulf %590, %562 : vector<1x1xf32>
    %593 = vector.broadcast %572 : f32 to vector<1x1xf32>
    %594 = arith.minimumf %592, %593 : vector<1x1xf32>
    %595 = arith.subf %562, %591 : vector<1x1xf32>
    %596 = arith.subf %595, %594 : vector<1x1xf32>
    %597 = vector.broadcast %570 : f32 to vector<1x1xf32>
    %598 = arith.mulf %10, %597 : vector<1x1xf32>
    %599 = arith.addf %596, %598 : vector<1x1xf32>
    %600 = arith.index_cast %c15_i32 : i32 to index
    %c0_106 = arith.constant 0 : index
    %601 = vector.load %arg8[%600, %c0_106] : memref<16x128xf32, #tpu.memory_space<vmem>>, vector<1x1xf32>
    tpu.vector_store %arg8[%600, %c0_106], %599 {strides = array<i32>} : memref<16x128xf32, #tpu.memory_space<vmem>>, vector<1x1xf32>,
    %602 = arith.index_cast %c15_i32 : i32 to index
    %c1_107 = arith.constant 1 : index
    %603 = vector.load %arg8[%602, %c1_107] : memref<16x128xf32, #tpu.memory_space<vmem>>, vector<1x1xf32>
    tpu.vector_store %arg8[%602, %c1_107], %589 {strides = array<i32>} : memref<16x128xf32, #tpu.memory_space<vmem>>, vector<1x1xf32>,
    %604 = arith.index_cast %c15_i32 : i32 to index
    %c2_108 = arith.constant 2 : index
    %605 = vector.load %arg8[%604, %c2_108] : memref<16x128xf32, #tpu.memory_space<vmem>>, vector<1x1xf32>
    tpu.vector_store %arg8[%604, %c2_108], %590 {strides = array<i32>} : memref<16x128xf32, #tpu.memory_space<vmem>>, vector<1x1xf32>,
    %c16_i32 = arith.constant 16 : i32
    return
  }
}

</mosaic_0001>

<llo_original>
// kernel: tpu_custom_call.1
$region0: #{tpu_custom_call.1}
  #allocation0 [shape = 'u32[]', space=smem, size = 0x4, offset = 0x4, fixed_abs, tag = 'smem constant byte address 0x4 - core index']
  #allocation1 [shape = 'u32[144,128]{1,0:T(1,128)}', space=vmem, size = 0x12000, scoped, tag = 'internal scratch']
  #allocation2 [shape = 'f32[1,1]{1,0:T(1,128)S(1)}', space=vmem, size = 0x200, scoped, tag = 'scoped memory for tpu_custom_call.1']
  %s0 = inlined_call_operand.vmem [shape: f32[2], index: 0, kind: input, shape index: {}]
  %s1 = inlined_call_operand.vmem [shape: f32[16], index: 1, kind: input, shape index: {}]
  %s2 = inlined_call_operand.vmem [shape: f32[16], index: 2, kind: input, shape index: {}]
  %s3 = inlined_call_operand.vmem [shape: f32[2,3], index: 3, kind: input, shape index: {}]
  %s4 = inlined_call_operand.vmem [shape: f32[2,3], index: 4, kind: input, shape index: {}]
  %s5 = inlined_call_operand.vmem [shape: f32[2,3], index: 5, kind: input, shape index: {}]
  %s6 = inlined_call_operand.vmem [shape: f32[2,1], index: 6, kind: input, shape index: {}]
  %s7 = inlined_call_operand.<no memory space> [shape: f32[1,1], index: 7, kind: input, shape index: {}]
  %s8 = inlined_call_operand.hbm [shape: f32[16,128], index: 8, kind: output, shape index: {}]
  %s9 = sld [smem:[#allocation0]]
  $region54: #{tpu_custom_call.1} parent=0
    _
  %s11 = ssub.s32 1, %s9
  %s12 = scalar_select 0, %s11, %s9
  %v13 = vstv %s7
  %14 = vst [vmem:[#allocation2] sm:$0x1] %v13
  $region1: #{tpu_custom_call.1} parent=0
    #allocation3 [shape = 'u8[512]{0}', space=smem, size = 0x200, scoped, tag = 'input window, operand 0, single buffered']
    #allocation4 [shape = 's32[1]{0}', space=sflag, size = 0x4, scoped, tag = 'scoped memory for tpu_custom_call.1']
    #allocation5 [shape = 's32[1]{0}', space=sflag, size = 0x4, scoped, tag = 'scoped memory for tpu_custom_call.1']
    #allocation6 [shape = 'u8[512]{0}', space=smem, size = 0x200, scoped, tag = 'input window, operand 1, single buffered']
    #allocation7 [shape = 's32[1]{0}', space=sflag, size = 0x4, scoped, tag = 'scoped memory for tpu_custom_call.1']
    #allocation8 [shape = 'u8[512]{0}', space=smem, size = 0x200, scoped, tag = 'input window, operand 2, single buffered']
    #allocation9 [shape = 'u8[8192]{0}', space=vmem, size = 0x2000, scoped, tag = 'output window, operand 0, single buffered']
    %15 = vsyncpa [#allocation5], 0
    %16 = vsyncpa [#allocation7], 0
    %17 = vsyncpa [#allocation4], 0
    // Predicated region
    $region2: #{tpu_custom_call.1} parent=1 // pred_check
      _
    $region3: #{tpu_custom_call.1} parent=1 // pred_check_branch
      %19 = sbr.rel (0) target = $region5
    $region4: #{tpu_custom_call.1} parent=1 // pred_region
      %s21 = ssub.s32 16, 16
      %22 = vsyncadd [#allocation5], %s21
      %s24 = sshll.u32 %s0, 4
      %s25 = int_to_ptr.vmem [resolvable:$true] %s24
      %27 = dma.vmem_to_smem %s25, 16, [#allocation3], [#allocation5]
    $region5: #{tpu_custom_call.1} parent=1 // pred_fallthru
      _
    // Predicated region
    $region6: #{tpu_custom_call.1} parent=1 // pred_check
      _
    $region7: #{tpu_custom_call.1} parent=1 // pred_check_branch
      %29 = sbr.rel (0) target = $region9
    $region8: #{tpu_custom_call.1} parent=1 // pred_region
      %s31 = ssub.s32 16, 16
      %32 = vsyncadd [#allocation7], %s31
      %s34 = sshll.u32 %s1, 4
      %s35 = int_to_ptr.vmem [resolvable:$true] %s34
      %37 = dma.vmem_to_smem %s35, 16, [#allocation6], [#allocation7]
    $region9: #{tpu_custom_call.1} parent=1 // pred_fallthru
      _
    // Predicated region
    $region10: #{tpu_custom_call.1} parent=1 // pred_check
      _
    $region11: #{tpu_custom_call.1} parent=1 // pred_check_branch
      %39 = sbr.rel (0) target = $region13
    $region12: #{tpu_custom_call.1} parent=1 // pred_region
      %s41 = ssub.s32 16, 16
      %42 = vsyncadd [#allocation7], %s41
      %s44 = sshll.u32 %s2, 4
      %s45 = int_to_ptr.vmem [resolvable:$true] %s44
      %47 = dma.vmem_to_smem %s45, 16, [#allocation8], [#allocation7]
    $region13: #{tpu_custom_call.1} parent=1 // pred_fallthru
      _
    // Predicated region
    $region14: #{tpu_custom_call.1} parent=1 // pred_check
      _
    $region15: #{tpu_custom_call.1} parent=1 // pred_check_branch
      %49 = sbr.rel (0) target = $region17
    $region16: #{tpu_custom_call.1} parent=1 // pred_region
      _
    $region17: #{tpu_custom_call.1} parent=1 // pred_fallthru
      _
    // Predicated region
    $region18: #{tpu_custom_call.1} parent=1 // pred_check
      _
    $region19: #{tpu_custom_call.1} parent=1 // pred_check_branch
      %51 = sbr.rel (0) target = $region21
    $region20: #{tpu_custom_call.1} parent=1 // pred_region
      _
    $region21: #{tpu_custom_call.1} parent=1 // pred_fallthru
      _
    // Predicated region
    $region22: #{tpu_custom_call.1} parent=1 // pred_check
      _
    $region23: #{tpu_custom_call.1} parent=1 // pred_check_branch
      %53 = sbr.rel (0) target = $region25
    $region24: #{tpu_custom_call.1} parent=1 // pred_region
      _
    $region25: #{tpu_custom_call.1} parent=1 // pred_fallthru
      _
    // Predicated region
    $region26: #{tpu_custom_call.1} parent=1 // pred_check
      _
    $region27: #{tpu_custom_call.1} parent=1 // pred_check_branch
      %55 = sbr.rel (0) target = $region29
    $region28: #{tpu_custom_call.1} parent=1 // pred_region
      _
    $region29: #{tpu_custom_call.1} parent=1 // pred_fallthru
      _
    // Predicated region
    $region30: #{tpu_custom_call.1} parent=1 // pred_check
      _
    $region31: #{tpu_custom_call.1} parent=1 // pred_check_branch
      %57 = sbr.rel (0) target = $region33
    $region32: #{tpu_custom_call.1} parent=1 // pred_region
      _
    $region33: #{tpu_custom_call.1} parent=1 // pred_fallthru
      _
    // Predicated region
    $region34: #{tpu_custom_call.1} parent=1 // pred_check
      _
    $region35: #{tpu_custom_call.1} parent=1 // pred_check_branch
      %59 = sbr.rel (0) target = $region37
    $region36: #{tpu_custom_call.1} parent=1 // pred_region
      %60 = dma.done [#allocation5], 16
    $region37: #{tpu_custom_call.1} parent=1 // pred_fallthru
      _
    // Predicated region
    $region38: #{tpu_custom_call.1} parent=1 // pred_check
      _
    $region39: #{tpu_custom_call.1} parent=1 // pred_check_branch
      %62 = sbr.rel (0) target = $region41
    $region40: #{tpu_custom_call.1} parent=1 // pred_region
      %63 = dma.done [#allocation7], 16
    $region41: #{tpu_custom_call.1} parent=1 // pred_fallthru
      _
    // Predicated region
    $region42: #{tpu_custom_call.1} parent=1 // pred_check
      _
    $region43: #{tpu_custom_call.1} parent=1 // pred_check_branch
      %65 = sbr.rel (0) target = $region45
    $region44: #{tpu_custom_call.1} parent=1 // pred_region
      %66 = dma.done [#allocation7], 16
    $region45: #{tpu_custom_call.1} parent=1 // pred_fallthru
      _
    %67 = sfence
    %s68 = sld [smem:[#allocation3]]
    %v69 = vstv %s68
    %s70 = sld [smem:[#allocation3 + $0x1]]
    %v71 = vstv %s70
    %v72 = vrcp.pop %v71
    %v73 = vmul.f32 1.0, %v72
    %v74 = vld [vmem:[%s3] sm:$0x3]
    %v75 = vld [vmem:[%s4] sm:$0x3]
    %v76 = vld [vmem:[%s5] sm:$0x3]
    %v77 = vld [vmem:[%s6] sm:$0x3]
    %v78 = vld [vmem:[#allocation2] sm:$0x1]
    %79 = vst [vmem:[#allocation9] sm:$0xff] 0.0
    %80 = vst [vmem:[#allocation9 + $0x8] sm:$0xff] 0.0
    %s81 = sld [smem:[#allocation6]]
    %s82 = sld [smem:[#allocation8]]
    %v83 = vsub.f32 0.0, %v69
    %v84 = vmul.f32 %v83, %v73
    %v85 = vmul.f32 %v84, %v74
    %v86 = vadd.f32 %v85, %v75
    %v87 = vtanh.pop %v86
    %v88 = vmul.f32 %v87, %v76
    %vm89 = vcmask 17408
    %v90 = vsel %vm89, %v88, 0.0
    %91 = vadd.xlane.f32.xlu0 %v90
    %v92 = vpop.xlane.xlu0 %91
    %v93 = vadd.f32 %v77, %v92
    %v94 = vsub.f32 0.0, %v93
    %v95 = vmul.f32 %v94, 1.442695
    %v96 = vpow.pop %v95
    %v97 = vadd.f32 %v96, 1.0
    %v98 = vrcp.pop %v97
    %v99 = vmul.f32 %v98, 0.0
    %v100 = vstv %s82
    %v101 = vmin.f32 %v99, %v100
    %v102 = vsub.f32 0.0, %v99
    %v104 = vrot.slane %v101, 1
    %v106 = vsub.f32 %v102, %v104
    %v107 = vstv %s81
    %v108 = vmul.f32 %v78, %v107
    %v109 = vadd.f32 %v106, %v108
    %vm110 = vcmask 0
    %111 = vst.msk [vmem:[#allocation9] sm:$0x1] %vm110, %v109
    %113 = vrot.lane.b32.xlu0 %v98, 1
    %v114 = vpop.permute.xlu0 %113
    %vm116 = vcmask 8200
    %117 = vst.msk [vmem:[#allocation9] sm:$0x1] %vm116, %v114
    %118 = vrot.lane.b32.xlu0 %v98, 2
    %v119 = vpop.permute.xlu0 %118
    %vm121 = vcmask 17425
    %122 = vst.msk [vmem:[#allocation9 - $0x1] sm:$0x2] %vm121, %v119
    %s123 = sld [smem:[#allocation6 + $0x1]]
    %s124 = sld [smem:[#allocation8 + $0x1]]
    %v125 = vsub.f32 %v109, %v69
    %v126 = vmul.f32 %v125, %v73
    %s128 = vtos %v126
    %v129 = vstv %s128
    %v131 = vmul.f32 %v129, %v74
    %v132 = vadd.f32 %v131, %v75
    %v133 = vtanh.pop %v132
    %v134 = vmul.f32 %v133, %v76
    %v135 = vsel %vm89, %v134, 0.0
    %136 = vadd.xlane.f32.xlu0 %v135
    %v137 = vpop.xlane.xlu0 %136
    %v138 = vadd.f32 %v77, %v137
    %v139 = vsub.f32 0.0, %v138
    %v140 = vmul.f32 %v139, 1.442695
    %v141 = vpow.pop %v140
    %v142 = vadd.f32 %v141, 1.0
    %v143 = vrcp.pop %v142
    %v144 = vmul.f32 %v143, %v109
    %v146 = vrot.slane %v109, 7
    %v148 = vmul.f32 %v143, %v146
    %v149 = vstv %s124
    %v150 = vmin.f32 %v148, %v149
    %v151 = vsub.f32 %v109, %v144
    %v153 = vrot.slane %v150, 1
    %v155 = vsub.f32 %v151, %v153
    %v156 = vstv %s123
    %v157 = vmul.f32 %v78, %v156
    %v158 = vadd.f32 %v155, %v157
    %159 = vst.msk [vmem:[#allocation9 + $0x1] sm:$0x1] %vm110, %v158
    %161 = vrot.lane.b32.xlu0 %v143, 1
    %v162 = vpop.permute.xlu0 %161
    %164 = vst.msk [vmem:[#allocation9 + $0x1] sm:$0x1] %vm116, %v162
    %165 = vrot.lane.b32.xlu0 %v143, 2
    %v166 = vpop.permute.xlu0 %165
    %168 = vst.msk [vmem:[#allocation9] sm:$0x2] %vm121, %v166
    %s169 = sld [smem:[#allocation6 + $0x2]]
    %s170 = sld [smem:[#allocation8 + $0x2]]
    %v171 = vsub.f32 %v158, %v69
    %v172 = vmul.f32 %v171, %v73
    %s174 = vtos %v172
    %v175 = vstv %s174
    %v177 = vmul.f32 %v175, %v74
    %v178 = vadd.f32 %v177, %v75
    %v179 = vtanh.pop %v178
    %v180 = vmul.f32 %v179, %v76
    %v181 = vsel %vm89, %v180, 0.0
    %182 = vadd.xlane.f32.xlu0 %v181
    %v183 = vpop.xlane.xlu0 %182
    %v184 = vadd.f32 %v77, %v183
    %v185 = vsub.f32 0.0, %v184
    %v186 = vmul.f32 %v185, 1.442695
    %v187 = vpow.pop %v186
    %v188 = vadd.f32 %v187, 1.0
    %v189 = vrcp.pop %v188
    %v190 = vmul.f32 %v189, %v158
    %v192 = vrot.slane %v158, 7
    %v194 = vmul.f32 %v189, %v192
    %v195 = vstv %s170
    %v196 = vmin.f32 %v194, %v195
    %v197 = vsub.f32 %v158, %v190
    %v199 = vrot.slane %v196, 1
    %v201 = vsub.f32 %v197, %v199
    %v202 = vstv %s169
    %v203 = vmul.f32 %v78, %v202
    %v204 = vadd.f32 %v201, %v203
    %205 = vst.msk [vmem:[#allocation9 + $0x2] sm:$0x1] %vm110, %v204
    %207 = vrot.lane.b32.xlu0 %v189, 1
    %v208 = vpop.permute.xlu0 %207
    %210 = vst.msk [vmem:[#allocation9 + $0x2] sm:$0x1] %vm116, %v208
    %211 = vrot.lane.b32.xlu0 %v189, 2
    %v212 = vpop.permute.xlu0 %211
    %214 = vst.msk [vmem:[#allocation9 + $0x1] sm:$0x2] %vm121, %v212
    %s215 = sld [smem:[#allocation6 + $0x3]]
    %s216 = sld [smem:[#allocation8 + $0x3]]
    %v217 = vsub.f32 %v204, %v69
    %v218 = vmul.f32 %v217, %v73
    %s220 = vtos %v218
    %v221 = vstv %s220
    %v223 = vmul.f32 %v221, %v74
    %v224 = vadd.f32 %v223, %v75
    %v225 = vtanh.pop %v224
    %v226 = vmul.f32 %v225, %v76
    %v227 = vsel %vm89, %v226, 0.0
    %228 = vadd.xlane.f32.xlu0 %v227
    %v229 = vpop.xlane.xlu0 %228
    %v230 = vadd.f32 %v77, %v229
    %v231 = vsub.f32 0.0, %v230
    %v232 = vmul.f32 %v231, 1.442695
    %v233 = vpow.pop %v232
    %v234 = vadd.f32 %v233, 1.0
    %v235 = vrcp.pop %v234
    %v236 = vmul.f32 %v235, %v204
    %v238 = vrot.slane %v204, 7
    %v240 = vmul.f32 %v235, %v238
    %v241 = vstv %s216
    %v242 = vmin.f32 %v240, %v241
    %v243 = vsub.f32 %v204, %v236
    %v245 = vrot.slane %v242, 1
    %v247 = vsub.f32 %v243, %v245
    %v248 = vstv %s215
    %v249 = vmul.f32 %v78, %v248
    %v250 = vadd.f32 %v247, %v249
    %251 = vst.msk [vmem:[#allocation9 + $0x3] sm:$0x1] %vm110, %v250
    %253 = vrot.lane.b32.xlu0 %v235, 1
    %v254 = vpop.permute.xlu0 %253
    %256 = vst.msk [vmem:[#allocation9 + $0x3] sm:$0x1] %vm116, %v254
    %257 = vrot.lane.b32.xlu0 %v235, 2
    %v258 = vpop.permute.xlu0 %257
    %260 = vst.msk [vmem:[#allocation9 + $0x2] sm:$0x2] %vm121, %v258
    %s261 = sld [smem:[#allocation6 + $0x4]]
    %s262 = sld [smem:[#allocation8 + $0x4]]
    %v263 = vsub.f32 %v250, %v69
    %v264 = vmul.f32 %v263, %v73
    %s266 = vtos %v264
    %v267 = vstv %s266
    %v269 = vmul.f32 %v267, %v74
    %v270 = vadd.f32 %v269, %v75
    %v271 = vtanh.pop %v270
    %v272 = vmul.f32 %v271, %v76
    %v273 = vsel %vm89, %v272, 0.0
    %274 = vadd.xlane.f32.xlu0 %v273
    %v275 = vpop.xlane.xlu0 %274
    %v276 = vadd.f32 %v77, %v275
    %v277 = vsub.f32 0.0, %v276
    %v278 = vmul.f32 %v277, 1.442695
    %v279 = vpow.pop %v278
    %v280 = vadd.f32 %v279, 1.0
    %v281 = vrcp.pop %v280
    %v282 = vmul.f32 %v281, %v250
    %v284 = vrot.slane %v250, 7
    %v286 = vmul.f32 %v281, %v284
    %v287 = vstv %s262
    %v288 = vmin.f32 %v286, %v287
    %v289 = vsub.f32 %v250, %v282
    %v291 = vrot.slane %v288, 1
    %v293 = vsub.f32 %v289, %v291
    %v294 = vstv %s261
    %v295 = vmul.f32 %v78, %v294
    %v296 = vadd.f32 %v293, %v295
    %297 = vst.msk [vmem:[#allocation9 + $0x4] sm:$0x1] %vm110, %v296
    %299 = vrot.lane.b32.xlu0 %v281, 1
    %v300 = vpop.permute.xlu0 %299
    %302 = vst.msk [vmem:[#allocation9 + $0x4] sm:$0x1] %vm116, %v300
    %303 = vrot.lane.b32.xlu0 %v281, 2
    %v304 = vpop.permute.xlu0 %303
    %306 = vst.msk [vmem:[#allocation9 + $0x3] sm:$0x2] %vm121, %v304
    %s307 = sld [smem:[#allocation6 + $0x5]]
    %s308 = sld [smem:[#allocation8 + $0x5]]
    %v309 = vsub.f32 %v296, %v69
    %v310 = vmul.f32 %v309, %v73
    %s312 = vtos %v310
    %v313 = vstv %s312
    %v315 = vmul.f32 %v313, %v74
    %v316 = vadd.f32 %v315, %v75
    %v317 = vtanh.pop %v316
    %v318 = vmul.f32 %v317, %v76
    %v319 = vsel %vm89, %v318, 0.0
    %320 = vadd.xlane.f32.xlu0 %v319
    %v321 = vpop.xlane.xlu0 %320
    %v322 = vadd.f32 %v77, %v321
    %v323 = vsub.f32 0.0, %v322
    %v324 = vmul.f32 %v323, 1.442695
    %v325 = vpow.pop %v324
    %v326 = vadd.f32 %v325, 1.0
    %v327 = vrcp.pop %v326
    %v328 = vmul.f32 %v327, %v296
    %v330 = vrot.slane %v296, 7
    %v332 = vmul.f32 %v327, %v330
    %v333 = vstv %s308
    %v334 = vmin.f32 %v332, %v333
    %v335 = vsub.f32 %v296, %v328
    %v337 = vrot.slane %v334, 1
    %v339 = vsub.f32 %v335, %v337
    %v340 = vstv %s307
    %v341 = vmul.f32 %v78, %v340
    %v342 = vadd.f32 %v339, %v341
    %343 = vst.msk [vmem:[#allocation9 + $0x5] sm:$0x1] %vm110, %v342
    %345 = vrot.lane.b32.xlu0 %v327, 1
    %v346 = vpop.permute.xlu0 %345
    %348 = vst.msk [vmem:[#allocation9 + $0x5] sm:$0x1] %vm116, %v346
    %349 = vrot.lane.b32.xlu0 %v327, 2
    %v350 = vpop.permute.xlu0 %349
    %352 = vst.msk [vmem:[#allocation9 + $0x4] sm:$0x2] %vm121, %v350
    %s353 = sld [smem:[#allocation6 + $0x6]]
    %s354 = sld [smem:[#allocation8 + $0x6]]
    %v355 = vsub.f32 %v342, %v69
    %v356 = vmul.f32 %v355, %v73
    %s358 = vtos %v356
    %v359 = vstv %s358
    %v361 = vmul.f32 %v359, %v74
    %v362 = vadd.f32 %v361, %v75
    %v363 = vtanh.pop %v362
    %v364 = vmul.f32 %v363, %v76
    %v365 = vsel %vm89, %v364, 0.0
    %366 = vadd.xlane.f32.xlu0 %v365
    %v367 = vpop.xlane.xlu0 %366
    %v368 = vadd.f32 %v77, %v367
    %v369 = vsub.f32 0.0, %v368
    %v370 = vmul.f32 %v369, 1.442695
    %v371 = vpow.pop %v370
    %v372 = vadd.f32 %v371, 1.0
    %v373 = vrcp.pop %v372
    %v374 = vmul.f32 %v373, %v342
    %v376 = vrot.slane %v342, 7
    %v378 = vmul.f32 %v373, %v376
    %v379 = vstv %s354
    %v380 = vmin.f32 %v378, %v379
    %v381 = vsub.f32 %v342, %v374
    %v383 = vrot.slane %v380, 1
    %v385 = vsub.f32 %v381, %v383
    %v386 = vstv %s353
    %v387 = vmul.f32 %v78, %v386
    %v388 = vadd.f32 %v385, %v387
    %389 = vst.msk [vmem:[#allocation9 + $0x6] sm:$0x1] %vm110, %v388
    %391 = vrot.lane.b32.xlu0 %v373, 1
    %v392 = vpop.permute.xlu0 %391
    %394 = vst.msk [vmem:[#allocation9 + $0x6] sm:$0x1] %vm116, %v392
    %395 = vrot.lane.b32.xlu0 %v373, 2
    %v396 = vpop.permute.xlu0 %395
    %398 = vst.msk [vmem:[#allocation9 + $0x5] sm:$0x2] %vm121, %v396
    %s399 = sld [smem:[#allocation6 + $0x7]]
    %s400 = sld [smem:[#allocation8 + $0x7]]
    %v401 = vsub.f32 %v388, %v69
    %v402 = vmul.f32 %v401, %v73
    %s404 = vtos %v402
    %v405 = vstv %s404
    %v407 = vmul.f32 %v405, %v74
    %v408 = vadd.f32 %v407, %v75
    %v409 = vtanh.pop %v408
    %v410 = vmul.f32 %v409, %v76
    %v411 = vsel %vm89, %v410, 0.0
    %412 = vadd.xlane.f32.xlu0 %v411
    %v413 = vpop.xlane.xlu0 %412
    %v414 = vadd.f32 %v77, %v413
    %v415 = vsub.f32 0.0, %v414
    %v416 = vmul.f32 %v415, 1.442695
    %v417 = vpow.pop %v416
    %v418 = vadd.f32 %v417, 1.0
    %v419 = vrcp.pop %v418
    %v420 = vmul.f32 %v419, %v388
    %v422 = vrot.slane %v388, 7
    %v424 = vmul.f32 %v419, %v422
    %v425 = vstv %s400
    %v426 = vmin.f32 %v424, %v425
    %v427 = vsub.f32 %v388, %v420
    %v429 = vrot.slane %v426, 1
    %v431 = vsub.f32 %v427, %v429
    %v432 = vstv %s399
    %v433 = vmul.f32 %v78, %v432
    %v434 = vadd.f32 %v431, %v433
    %435 = vst.msk [vmem:[#allocation9 + $0x7] sm:$0x1] %vm110, %v434
    %437 = vrot.lane.b32.xlu0 %v419, 1
    %v438 = vpop.permute.xlu0 %437
    %440 = vst.msk [vmem:[#allocation9 + $0x7] sm:$0x1] %vm116, %v438
    %441 = vrot.lane.b32.xlu0 %v419, 2
    %v442 = vpop.permute.xlu0 %441
    %444 = vst.msk [vmem:[#allocation9 + $0x6] sm:$0x2] %vm121, %v442
    %s445 = sld [smem:[#allocation6 + $0x8]]
    %s446 = sld [smem:[#allocation8 + $0x8]]
    %v447 = vsub.f32 %v434, %v69
    %v448 = vmul.f32 %v447, %v73
    %s450 = vtos %v448
    %v451 = vstv %s450
    %v453 = vmul.f32 %v451, %v74
    %v454 = vadd.f32 %v453, %v75
    %v455 = vtanh.pop %v454
    %v456 = vmul.f32 %v455, %v76
    %v457 = vsel %vm89, %v456, 0.0
    %458 = vadd.xlane.f32.xlu0 %v457
    %v459 = vpop.xlane.xlu0 %458
    %v460 = vadd.f32 %v77, %v459
    %v461 = vsub.f32 0.0, %v460
    %v462 = vmul.f32 %v461, 1.442695
    %v463 = vpow.pop %v462
    %v464 = vadd.f32 %v463, 1.0
    %v465 = vrcp.pop %v464
    %v466 = vmul.f32 %v465, %v434
    %v468 = vrot.slane %v434, 7
    %v470 = vmul.f32 %v465, %v468
    %v471 = vstv %s446
    %v472 = vmin.f32 %v470, %v471
    %v473 = vsub.f32 %v434, %v466
    %v475 = vrot.slane %v472, 1
    %v477 = vsub.f32 %v473, %v475
    %v478 = vstv %s445
    %v479 = vmul.f32 %v78, %v478
    %v480 = vadd.f32 %v477, %v479
    %481 = vst.msk [vmem:[#allocation9 + $0x8] sm:$0x1] %vm110, %v480
    %483 = vrot.lane.b32.xlu0 %v465, 1
    %v484 = vpop.permute.xlu0 %483
    %486 = vst.msk [vmem:[#allocation9 + $0x8] sm:$0x1] %vm116, %v484
    %487 = vrot.lane.b32.xlu0 %v465, 2
    %v488 = vpop.permute.xlu0 %487
    %490 = vst.msk [vmem:[#allocation9 + $0x7] sm:$0x2] %vm121, %v488
    %s491 = sld [smem:[#allocation6 + $0x9]]
    %s492 = sld [smem:[#allocation8 + $0x9]]
    %v493 = vsub.f32 %v480, %v69
    %v494 = vmul.f32 %v493, %v73
    %s496 = vtos %v494
    %v497 = vstv %s496
    %v499 = vmul.f32 %v497, %v74
    %v500 = vadd.f32 %v499, %v75
    %v501 = vtanh.pop %v500
    %v502 = vmul.f32 %v501, %v76
    %v503 = vsel %vm89, %v502, 0.0
    %504 = vadd.xlane.f32.xlu0 %v503
    %v505 = vpop.xlane.xlu0 %504
    %v506 = vadd.f32 %v77, %v505
    %v507 = vsub.f32 0.0, %v506
    %v508 = vmul.f32 %v507, 1.442695
    %v509 = vpow.pop %v508
    %v510 = vadd.f32 %v509, 1.0
    %v511 = vrcp.pop %v510
    %v512 = vmul.f32 %v511, %v480
    %v514 = vrot.slane %v480, 7
    %v516 = vmul.f32 %v511, %v514
    %v517 = vstv %s492
    %v518 = vmin.f32 %v516, %v517
    %v519 = vsub.f32 %v480, %v512
    %v521 = vrot.slane %v518, 1
    %v523 = vsub.f32 %v519, %v521
    %v524 = vstv %s491
    %v525 = vmul.f32 %v78, %v524
    %v526 = vadd.f32 %v523, %v525
    %527 = vst.msk [vmem:[#allocation9 + $0x9] sm:$0x1] %vm110, %v526
    %529 = vrot.lane.b32.xlu0 %v511, 1
    %v530 = vpop.permute.xlu0 %529
    %532 = vst.msk [vmem:[#allocation9 + $0x9] sm:$0x1] %vm116, %v530
    %533 = vrot.lane.b32.xlu0 %v511, 2
    %v534 = vpop.permute.xlu0 %533
    %536 = vst.msk [vmem:[#allocation9 + $0x8] sm:$0x2] %vm121, %v534
    %s537 = sld [smem:[#allocation6 + $0xa]]
    %s538 = sld [smem:[#allocation8 + $0xa]]
    %v539 = vsub.f32 %v526, %v69
    %v540 = vmul.f32 %v539, %v73
    %s542 = vtos %v540
    %v543 = vstv %s542
    %v545 = vmul.f32 %v543, %v74
    %v546 = vadd.f32 %v545, %v75
    %v547 = vtanh.pop %v546
    %v548 = vmul.f32 %v547, %v76
    %v549 = vsel %vm89, %v548, 0.0
    %550 = vadd.xlane.f32.xlu0 %v549
    %v551 = vpop.xlane.xlu0 %550
    %v552 = vadd.f32 %v77, %v551
    %v553 = vsub.f32 0.0, %v552
    %v554 = vmul.f32 %v553, 1.442695
    %v555 = vpow.pop %v554
    %v556 = vadd.f32 %v555, 1.0
    %v557 = vrcp.pop %v556
    %v558 = vmul.f32 %v557, %v526
    %v560 = vrot.slane %v526, 7
    %v562 = vmul.f32 %v557, %v560
    %v563 = vstv %s538
    %v564 = vmin.f32 %v562, %v563
    %v565 = vsub.f32 %v526, %v558
    %v567 = vrot.slane %v564, 1
    %v569 = vsub.f32 %v565, %v567
    %v570 = vstv %s537
    %v571 = vmul.f32 %v78, %v570
    %v572 = vadd.f32 %v569, %v571
    %573 = vst.msk [vmem:[#allocation9 + $0xa] sm:$0x1] %vm110, %v572
    %575 = vrot.lane.b32.xlu0 %v557, 1
    %v576 = vpop.permute.xlu0 %575
    %578 = vst.msk [vmem:[#allocation9 + $0xa] sm:$0x1] %vm116, %v576
    %579 = vrot.lane.b32.xlu0 %v557, 2
    %v580 = vpop.permute.xlu0 %579
    %582 = vst.msk [vmem:[#allocation9 + $0x9] sm:$0x2] %vm121, %v580
    %s583 = sld [smem:[#allocation6 + $0xb]]
    %s584 = sld [smem:[#allocation8 + $0xb]]
    %v585 = vsub.f32 %v572, %v69
    %v586 = vmul.f32 %v585, %v73
    %s588 = vtos %v586
    %v589 = vstv %s588
    %v591 = vmul.f32 %v589, %v74
    %v592 = vadd.f32 %v591, %v75
    %v593 = vtanh.pop %v592
    %v594 = vmul.f32 %v593, %v76
    %v595 = vsel %vm89, %v594, 0.0
    %596 = vadd.xlane.f32.xlu0 %v595
    %v597 = vpop.xlane.xlu0 %596
    %v598 = vadd.f32 %v77, %v597
    %v599 = vsub.f32 0.0, %v598
    %v600 = vmul.f32 %v599, 1.442695
    %v601 = vpow.pop %v600
    %v602 = vadd.f32 %v601, 1.0
    %v603 = vrcp.pop %v602
    %v604 = vmul.f32 %v603, %v572
    %v606 = vrot.slane %v572, 7
    %v608 = vmul.f32 %v603, %v606
    %v609 = vstv %s584
    %v610 = vmin.f32 %v608, %v609
    %v611 = vsub.f32 %v572, %v604
    %v613 = vrot.slane %v610, 1
    %v615 = vsub.f32 %v611, %v613
    %v616 = vstv %s583
    %v617 = vmul.f32 %v78, %v616
    %v618 = vadd.f32 %v615, %v617
    %619 = vst.msk [vmem:[#allocation9 + $0xb] sm:$0x1] %vm110, %v618
    %621 = vrot.lane.b32.xlu0 %v603, 1
    %v622 = vpop.permute.xlu0 %621
    %624 = vst.msk [vmem:[#allocation9 + $0xb] sm:$0x1] %vm116, %v622
    %625 = vrot.lane.b32.xlu0 %v603, 2
    %v626 = vpop.permute.xlu0 %625
    %628 = vst.msk [vmem:[#allocation9 + $0xa] sm:$0x2] %vm121, %v626
    %s629 = sld [smem:[#allocation6 + $0xc]]
    %s630 = sld [smem:[#allocation8 + $0xc]]
    %v631 = vsub.f32 %v618, %v69
    %v632 = vmul.f32 %v631, %v73
    %s634 = vtos %v632
    %v635 = vstv %s634
    %v637 = vmul.f32 %v635, %v74
    %v638 = vadd.f32 %v637, %v75
    %v639 = vtanh.pop %v638
    %v640 = vmul.f32 %v639, %v76
    %v641 = vsel %vm89, %v640, 0.0
    %642 = vadd.xlane.f32.xlu0 %v641
    %v643 = vpop.xlane.xlu0 %642
    %v644 = vadd.f32 %v77, %v643
    %v645 = vsub.f32 0.0, %v644
    %v646 = vmul.f32 %v645, 1.442695
    %v647 = vpow.pop %v646
    %v648 = vadd.f32 %v647, 1.0
    %v649 = vrcp.pop %v648
    %v650 = vmul.f32 %v649, %v618
    %v652 = vrot.slane %v618, 7
    %v654 = vmul.f32 %v649, %v652
    %v655 = vstv %s630
    %v656 = vmin.f32 %v654, %v655
    %v657 = vsub.f32 %v618, %v650
    %v659 = vrot.slane %v656, 1
    %v661 = vsub.f32 %v657, %v659
    %v662 = vstv %s629
    %v663 = vmul.f32 %v78, %v662
    %v664 = vadd.f32 %v661, %v663
    %665 = vst.msk [vmem:[#allocation9 + $0xc] sm:$0x1] %vm110, %v664
    %667 = vrot.lane.b32.xlu0 %v649, 1
    %v668 = vpop.permute.xlu0 %667
    %670 = vst.msk [vmem:[#allocation9 + $0xc] sm:$0x1] %vm116, %v668
    %671 = vrot.lane.b32.xlu0 %v649, 2
    %v672 = vpop.permute.xlu0 %671
    %674 = vst.msk [vmem:[#allocation9 + $0xb] sm:$0x2] %vm121, %v672
    %s675 = sld [smem:[#allocation6 + $0xd]]
    %s676 = sld [smem:[#allocation8 + $0xd]]
    %v677 = vsub.f32 %v664, %v69
    %v678 = vmul.f32 %v677, %v73
    %s680 = vtos %v678
    %v681 = vstv %s680
    %v683 = vmul.f32 %v681, %v74
    %v684 = vadd.f32 %v683, %v75
    %v685 = vtanh.pop %v684
    %v686 = vmul.f32 %v685, %v76
    %v687 = vsel %vm89, %v686, 0.0
    %688 = vadd.xlane.f32.xlu0 %v687
    %v689 = vpop.xlane.xlu0 %688
    %v690 = vadd.f32 %v77, %v689
    %v691 = vsub.f32 0.0, %v690
    %v692 = vmul.f32 %v691, 1.442695
    %v693 = vpow.pop %v692
    %v694 = vadd.f32 %v693, 1.0
    %v695 = vrcp.pop %v694
    %v696 = vmul.f32 %v695, %v664
    %v698 = vrot.slane %v664, 7
    %v700 = vmul.f32 %v695, %v698
    %v701 = vstv %s676
    %v702 = vmin.f32 %v700, %v701
    %v703 = vsub.f32 %v664, %v696
    %v705 = vrot.slane %v702, 1
    %v707 = vsub.f32 %v703, %v705
    %v708 = vstv %s675
    %v709 = vmul.f32 %v78, %v708
    %v710 = vadd.f32 %v707, %v709
    %711 = vst.msk [vmem:[#allocation9 + $0xd] sm:$0x1] %vm110, %v710
    %713 = vrot.lane.b32.xlu0 %v695, 1
    %v714 = vpop.permute.xlu0 %713
    %716 = vst.msk [vmem:[#allocation9 + $0xd] sm:$0x1] %vm116, %v714
    %717 = vrot.lane.b32.xlu0 %v695, 2
    %v718 = vpop.permute.xlu0 %717
    %720 = vst.msk [vmem:[#allocation9 + $0xc] sm:$0x2] %vm121, %v718
    %s721 = sld [smem:[#allocation6 + $0xe]]
    %s722 = sld [smem:[#allocation8 + $0xe]]
    %v723 = vsub.f32 %v710, %v69
    %v724 = vmul.f32 %v723, %v73
    %s726 = vtos %v724
    %v727 = vstv %s726
    %v729 = vmul.f32 %v727, %v74
    %v730 = vadd.f32 %v729, %v75
    %v731 = vtanh.pop %v730
    %v732 = vmul.f32 %v731, %v76
    %v733 = vsel %vm89, %v732, 0.0
    %734 = vadd.xlane.f32.xlu0 %v733
    %v735 = vpop.xlane.xlu0 %734
    %v736 = vadd.f32 %v77, %v735
    %v737 = vsub.f32 0.0, %v736
    %v738 = vmul.f32 %v737, 1.442695
    %v739 = vpow.pop %v738
    %v740 = vadd.f32 %v739, 1.0
    %v741 = vrcp.pop %v740
    %v742 = vmul.f32 %v741, %v710
    %v744 = vrot.slane %v710, 7
    %v746 = vmul.f32 %v741, %v744
    %v747 = vstv %s722
    %v748 = vmin.f32 %v746, %v747
    %v749 = vsub.f32 %v710, %v742
    %v751 = vrot.slane %v748, 1
    %v753 = vsub.f32 %v749, %v751
    %v754 = vstv %s721
    %v755 = vmul.f32 %v78, %v754
    %v756 = vadd.f32 %v753, %v755
    %757 = vst.msk [vmem:[#allocation9 + $0xe] sm:$0x1] %vm110, %v756
    %759 = vrot.lane.b32.xlu0 %v741, 1
    %v760 = vpop.permute.xlu0 %759
    %762 = vst.msk [vmem:[#allocation9 + $0xe] sm:$0x1] %vm116, %v760
    %763 = vrot.lane.b32.xlu0 %v741, 2
    %v764 = vpop.permute.xlu0 %763
    %766 = vst.msk [vmem:[#allocation9 + $0xd] sm:$0x2] %vm121, %v764
    %s767 = sld [smem:[#allocation6 + $0xf]]
    %s768 = sld [smem:[#allocation8 + $0xf]]
    %v769 = vsub.f32 %v756, %v69
    %v770 = vmul.f32 %v769, %v73
    %s772 = vtos %v770
    %v773 = vstv %s772
    %v775 = vmul.f32 %v773, %v74
    %v776 = vadd.f32 %v775, %v75
    %v777 = vtanh.pop %v776
    %v778 = vmul.f32 %v777, %v76
    %v779 = vsel %vm89, %v778, 0.0
    %780 = vadd.xlane.f32.xlu0 %v779
    %v781 = vpop.xlane.xlu0 %780
    %v782 = vadd.f32 %v77, %v781
    %v783 = vsub.f32 0.0, %v782
    %v784 = vmul.f32 %v783, 1.442695
    %v785 = vpow.pop %v784
    %v786 = vadd.f32 %v785, 1.0
    %v787 = vrcp.pop %v786
    %v788 = vmul.f32 %v787, %v756
    %v790 = vrot.slane %v756, 7
    %v792 = vmul.f32 %v787, %v790
    %v793 = vstv %s768
    %v794 = vmin.f32 %v792, %v793
    %v795 = vsub.f32 %v756, %v788
    %v797 = vrot.slane %v794, 1
    %v799 = vsub.f32 %v795, %v797
    %v800 = vstv %s767
    %v801 = vmul.f32 %v78, %v800
    %v802 = vadd.f32 %v799, %v801
    %803 = vst.msk [vmem:[#allocation9 + $0xf] sm:$0x1] %vm110, %v802
    %805 = vrot.lane.b32.xlu0 %v787, 1
    %v806 = vpop.permute.xlu0 %805
    %808 = vst.msk [vmem:[#allocation9 + $0xf] sm:$0x1] %vm116, %v806
    %809 = vrot.lane.b32.xlu0 %v787, 2
    %v810 = vpop.permute.xlu0 %809
    %812 = vst.msk [vmem:[#allocation9 + $0xe] sm:$0x2] %vm121, %v810
    // Predicated region
    $region46: #{tpu_custom_call.1} parent=1 // pred_check
      _
    $region47: #{tpu_custom_call.1} parent=1 // pred_check_branch
      %814 = sbr.rel (0) target = $region49
    $region48: #{tpu_custom_call.1} parent=1 // pred_region
      %s816 = ssub.s32 256, 256
      %817 = vsyncadd [#allocation4], %s816
      %s818 = sshll.u32 [#allocation9], 4
      %s819 = int_to_ptr.vmem [resolvable:$true] %s818
      %824 = dma.vmem_to_hbm [thread:$0]  %s819, 256, %s8, [#allocation4], 128, 128, 8
    $region49: #{tpu_custom_call.1} parent=1 // pred_fallthru
      _
    // Predicated region
    $region50: #{tpu_custom_call.1} parent=1 // pred_check
      _
    $region51: #{tpu_custom_call.1} parent=1 // pred_check_branch
      %826 = sbr.rel (0) target = $region53
    $region52: #{tpu_custom_call.1} parent=1 // pred_region
      %827 = dma.done [#allocation4], 256
    $region53: #{tpu_custom_call.1} parent=1 // pred_fallthru
      _
    %828 = vsyncpa [#allocation4], 1
    %829 = vsyncpa [#allocation5], 1
    %830 = vsyncpa [#allocation7], 1

</llo_original>
